<compile_context>
chip_gen: v5e
topology: v5e:2x2
jax: 0.10.0
libtpu: 0.0.40
codegen_flags: <defaults>
</compile_context>

<pallas_src>
import math

import jax
import jax.numpy as jnp
from jax.experimental import pallas as pl
from jax.experimental.pallas import tpu as pltpu

HIDDEN_FEATURES = 100   # F (real feature width)
F_PAD = 128             # lane-padded feature width
BN_EPS = 1e-5


def _make_gnn_kernel(n_nodes, n_pad, f_pad, e_pad, n_blocks):
    """Build the fused 3-block GNN kernel (all sizes are static Python ints)."""
    inv_n = 1.0 / float(n_nodes)

    def kernel(x_ref, src_ref, dst_ref, w_ref, b_ref, bn_ref,
               x_out_ref, alpha_out_ref):
        x = x_ref[...]                                        # [Np, Fp] f32

        # ---- edge one-hots built in-kernel (pad edge slots have id == -1) ----
        # bf16 one-hots are exact for 0/1 data, halve VMEM, and give native
        # bf16 MXU matmuls for the adjacency build and the final alpha gather.
        node_iota = jax.lax.broadcasted_iota(jnp.int32, (n_pad, e_pad), 0)
        d_t = (node_iota == dst_ref[...]).astype(jnp.bfloat16)  # [Np, Ep] one-hot(dst)
        s_t = (node_iota == src_ref[...]).astype(jnp.bfloat16)  # [Np, Ep] one-hot(src)

        # adjacency count[dst, src]; mask + additive bias built ONCE outside the
        # conv loop (6 adds replace 6 compare+select passes over [Np,Np]).
        adj = jax.lax.dot_general(d_t, s_t, (((1,), (1,)), ((), ())),
                                  preferred_element_type=jnp.float32)  # [Np, Np]
        has_edge = adj > 0.5
        mask = has_edge.astype(jnp.float32)
        bias = jnp.where(has_edge, 0.0, -1e30).astype(jnp.float32)

        # pad node rows excluded from BatchNorm statistics ([Np,1] column only)
        if n_nodes != n_pad:
            row_valid = (jax.lax.broadcasted_iota(jnp.int32, (n_pad, 1), 0)
                         < n_nodes).astype(jnp.float32)
        else:
            row_valid = None

        def transformer_conv(xin, c):
            # Fused (query | key | value | skip) projection: one bf16 MXU pass,
            # f32 accumulation. 1/sqrt(C) already folded into the query columns.
            w = w_ref[c]                                      # [Fp, 4*Fp] bf16
            b = b_ref[c]                                      # [1, 4*Fp]  f32
            proj = jnp.dot(xin.astype(jnp.bfloat16), w,
                           preferred_element_type=jnp.float32) + b
            q = proj[:, 0 * f_pad:1 * f_pad]
            k = proj[:, 1 * f_pad:2 * f_pad]
            v = proj[:, 2 * f_pad:3 * f_pad]
            skip = proj[:, 3 * f_pad:4 * f_pad]

            # scores[dst, src] = <q_dst, k_src> (scale pre-folded, no k.T)
            scores = jax.lax.dot_general(
                q.astype(jnp.bfloat16), k.astype(jnp.bfloat16),
                (((1,), (1,)), ((), ())),
                preferred_element_type=jnp.float32)
            s_m = scores + bias
            m = jnp.max(s_m, axis=-1, keepdims=True)
            e = jnp.exp(s_m - m) * mask
            denom = jnp.sum(e, axis=-1, keepdims=True)
            # targets with no incoming edge keep alpha == 0 (skip-only output)
            alpha = e * pl.reciprocal(jnp.maximum(denom, 1e-16), approx=True)

            out = jnp.dot(alpha.astype(jnp.bfloat16), v.astype(jnp.bfloat16),
                          preferred_element_type=jnp.float32) + skip
            return out, alpha

        def batchnorm(h, c):
            # training-mode BatchNorm1d, one-pass stats: var = E[x^2] - mean^2,
            # fused affine (2 VPU ops/element on the [Np,Fp] tile).
            bn = bn_ref[c]                                    # [2, Fp] (gamma, beta)
            hm = h if row_valid is None else h * row_valid
            s1 = jnp.sum(hm, axis=0, keepdims=True)
            s2 = jnp.sum(hm * hm, axis=0, keepdims=True)
            mean = s1 * inv_n
            var = jnp.maximum(s2 * inv_n - mean * mean, 0.0)
            scale = bn[0:1, :] * jax.lax.rsqrt(var + BN_EPS)
            shift = bn[1:2, :] - mean * scale
            return h * scale + shift

        alpha_acc = jnp.zeros((n_pad, n_pad), jnp.float32)
        for blk in range(n_blocks):
            c1 = 2 * blk
            c2 = 2 * blk + 1
            x0 = x
            h, a1 = transformer_conv(x0, c1)
            h = jnp.maximum(batchnorm(h, c1), 0.0)            # bn1 + relu
            h, a2 = transformer_conv(h, c2)
            h = jnp.maximum(batchnorm(h, c2) + x0, 0.0)       # bn2 + residual + relu
            x = h
            alpha_acc = alpha_acc + a1 + a2                   # sum of all per-conv alphas

        x_out_ref[...] = x

        # per-edge gather: alpha_edge[e] = alpha_acc[dst[e], src[e]]
        # (bf16 gather matmul: alpha values are <= n_convs, relative rounding
        #  ~4e-3, on top of the approx-reciprocal softmax already used)
        gathered = jnp.dot(alpha_acc.astype(jnp.bfloat16), s_t,
                           preferred_element_type=jnp.float32)        # [Np, Ep]
        alpha_out_ref[...] = jnp.sum(d_t.astype(jnp.float32) * gathered,
                                     axis=0, keepdims=True)           # [1, Ep]

    return kernel


def _stack_params(params, f, f_pad):
    """Stack + zero-pad per-conv parameters.

    Returns ([6,Fp,4Fp] bf16 weights with 1/sqrt(C) folded into the query
    columns, [6,1,4Fp] f32 biases (query bias also pre-scaled), [6,2,Fp] f32 BN).
    """
    inv_sqrt_c = 1.0 / math.sqrt(float(f))   # PyG scales q.k by 1/sqrt(out_channels)
    w_list, b_list, bn_list = [], [], []
    for blk in params:
        for j in (1, 2):
            w = blk[f"w{j}"]          # [4, F, F]   (query, key, value, skip)
            b = blk[f"b{j}"]          # [4, F]
            bn = blk[f"bn{j}"]        # [2, F]      (gamma, beta)
            w_f = jnp.zeros((f_pad, 4 * f_pad), jnp.float32)
            b_f = jnp.zeros((1, 4 * f_pad), jnp.float32)
            for i in range(4):
                scale = inv_sqrt_c if i == 0 else 1.0   # fold into query proj
                w_f = w_f.at[:f, i * f_pad:i * f_pad + f].set(w[i] * scale)
                b_f = b_f.at[0, i * f_pad:i * f_pad + f].set(b[i] * scale)
            bn_f = jnp.zeros((2, f_pad), jnp.float32).at[:, :f].set(bn)
            w_list.append(w_f)
            b_list.append(b_f)
            bn_list.append(bn_f)
    return (jnp.stack(w_list).astype(jnp.bfloat16),
            jnp.stack(b_list), jnp.stack(bn_list))


def gnn_layer(x, edge_index, params):
    """Full GNNLayer forward: returns (x, (edge_index, summed per-edge alpha))."""
    n, f = x.shape
    assert f == HIDDEN_FEATURES
    n_pad = max(8, ((n + 7) // 8) * 8)
    f_pad = F_PAD
    e = edge_index.shape[1]
    e_pad = max(128, ((e + 127) // 128) * 128)
    n_blocks = len(params)
    n_convs = 2 * n_blocks

    # lane-dense, zero-padded inputs
    x_pad = jnp.zeros((n_pad, f_pad), jnp.float32).at[:n, :f].set(x)
    src = edge_index[0].astype(jnp.int32)
    dst = edge_index[1].astype(jnp.int32)
    src_ids = jnp.full((1, e_pad), -1, jnp.int32).at[0, :e].set(src)
    dst_ids = jnp.full((1, e_pad), -1, jnp.int32).at[0, :e].set(dst)

    w_all, b_all, bn_all = _stack_params(params, f, f_pad)

    kernel = _make_gnn_kernel(n, n_pad, f_pad, e_pad, n_blocks)

    # rough cost estimate (helps XLA schedule the opaque custom call)
    flops = n_convs * (2 * n_pad * f_pad * 4 * f_pad      # fused projection
                       + 2 * n_pad * f_pad * n_pad        # q·k^T
                       + 2 * n_pad * n_pad * f_pad)       # alpha·v
    flops += 2 * n_pad * e_pad * n_pad * 2                # mask + edge gather
    transcendentals = n_convs * (n_pad * n_pad + 3 * n_pad)  # exp + rsqrt + recip
    bytes_accessed = (4 * (2 * x_pad.size + src_ids.size + dst_ids.size
                           + b_all.size + bn_all.size + e_pad)
                      + 2 * w_all.size)

    # explicit scoped-VMEM limit: whole-graph-in-VMEM footprint with 2x headroom
    footprint = (2 * n_pad * f_pad * 4                    # x in / out (f32)
                 + w_all.size * 2 + b_all.size * 4 + bn_all.size * 4
                 + 2 * n_pad * e_pad * 2                  # bf16 one-hots
                 + 4 * n_pad * n_pad * 4                  # adj / mask / bias / alpha_acc
                 + 6 * n_pad * n_pad * 4                  # per-conv score temporaries
                 + 2 * n_pad * 4 * f_pad * 4              # projection temporaries
                 + n_pad * e_pad * 4 + e_pad * 4)         # gather temp + alpha out
    vmem_limit = int(min(max(2 * footprint, 32 * 1024 * 1024), 64 * 1024 * 1024))

    vmem = pl.BlockSpec(memory_space=pltpu.MemorySpace.VMEM)
    x_out_pad, alpha_row = pl.pallas_call(
        kernel,
        out_shape=(jax.ShapeDtypeStruct((n_pad, f_pad), jnp.float32),
                   jax.ShapeDtypeStruct((1, e_pad), jnp.float32)),
        in_specs=[vmem] * 6,
        out_specs=(vmem, vmem),
        input_output_aliases={0: 0},   # reuse the x buffer for the x output
        compiler_params=pltpu.CompilerParams(vmem_limit_bytes=vmem_limit),
        cost_estimate=pl.CostEstimate(flops=int(flops),
                                      transcendentals=int(transcendentals),
                                      bytes_accessed=int(bytes_accessed)),
    )(x_pad, src_ids, dst_ids, w_all, b_all, bn_all)

    x_out = x_out_pad[:n, :f]
    alpha = alpha_row[0, :e][:, None]          # [E, 1], PyG heads=1 layout
    return x_out, (edge_index, alpha)


def init_params(key):
    """Deterministic synthetic parameters for 3 ConvResidualBlocks."""
    params = []
    for _ in range(3):
        blk = {}
        for c in (1, 2):
            key, kw, kb = jax.random.split(key, 3)
            # Stacked (query, key, value, skip) linears: [4, F_in, F_out] + [4, F_out]
            blk[f"w{c}"] = 0.05 * jax.random.normal(
                kw, (4, HIDDEN_FEATURES, HIDDEN_FEATURES), jnp.float32)
            blk[f"b{c}"] = 0.05 * jax.random.normal(
                kb, (4, HIDDEN_FEATURES), jnp.float32)
            # BatchNorm: gamma=1, beta=0 (fresh torch module)
            blk[f"bn{c}"] = jnp.stack([
                jnp.ones((HIDDEN_FEATURES,), jnp.float32),
                jnp.zeros((HIDDEN_FEATURES,), jnp.float32),
            ])
        params.append(blk)
    return params


if __name__ == "__main__":
    key = jax.random.PRNGKey(0)
    kx, kp = jax.random.split(key)

    N = 8                                    # number of graph nodes
    x = jax.random.normal(kx, (N, HIDDEN_FEATURES), jnp.float32)

    # Bidirectional ring graph: 2*N unique directed edges, every node has
    # at least one incoming edge.
    idx = jnp.arange(N, dtype=jnp.int32)
    src = jnp.concatenate([idx, (idx + 1) % N])
    dst = jnp.concatenate([(idx + 1) % N, idx])
    edge_index = jnp.stack([src, dst])       # [2, E], E = 16

    params = init_params(kp)

    gnn = jax.jit(gnn_layer)
    x_out, (ei_out, alpha_out) = gnn(x, edge_index, params)
    jax.block_until_ready((x_out, alpha_out))

    assert x_out.shape == (N, HIDDEN_FEATURES)
    assert x_out.dtype == jnp.float32
    assert ei_out.shape == edge_index.shape
    assert alpha_out.shape == (edge_index.shape[1], 1)
    assert bool(jnp.all(jnp.isfinite(x_out)))
    assert bool(jnp.all(jnp.isfinite(alpha_out)))
    assert bool(jnp.all(alpha_out >= 0.0))

    print("KERNEL_OK")
</pallas_src>

<mosaic_0001>
module attributes {stable_mosaic.version = 11 : i64} {
  func.func @kernel(%arg0: memref<8x128xf32, #tpu.memory_space<vmem>>, %arg1: memref<1x128xi32, #tpu.memory_space<vmem>>, %arg2: memref<1x128xi32, #tpu.memory_space<vmem>>, %arg3: memref<6x128x512xbf16, #tpu.memory_space<vmem>>, %arg4: memref<6x1x512xf32, #tpu.memory_space<vmem>>, %arg5: memref<6x2x128xf32, #tpu.memory_space<vmem>>, %arg6: memref<8x128xf32, #tpu.memory_space<vmem>>, %arg7: memref<1x128xf32, #tpu.memory_space<vmem>>) attributes {dimension_semantics = [], scalar_prefetch = 0 : i64, scratch_operands = 0 : i64, tpu.core_type = #tpu.core_type<tc>} {
    %c0 = arith.constant 0 : index
    %c0_0 = arith.constant 0 : index
    %0 = vector.load %arg0[%c0, %c0_0] : memref<8x128xf32, #tpu.memory_space<vmem>>, vector<8x128xf32>
    %1 = tpu.iota {dimensions = array<i32: 0>} : vector<8x128xi32>
    %c0_1 = arith.constant 0 : index
    %c0_2 = arith.constant 0 : index
    %2 = vector.load %arg2[%c0_1, %c0_2] : memref<1x128xi32, #tpu.memory_space<vmem>>, vector<1x128xi32>
    %3 = vector.broadcast %2 : vector<1x128xi32> to vector<8x128xi32>
    %4 = arith.cmpi eq, %1, %3 : vector<8x128xi32>
    %5 = arith.extui %4 : vector<8x128xi1> to vector<8x128xi32>
    %6 = arith.sitofp %5 : vector<8x128xi32> to vector<8x128xf32>
    %7 = arith.truncf %6 : vector<8x128xf32> to vector<8x128xbf16>
    %c0_3 = arith.constant 0 : index
    %c0_4 = arith.constant 0 : index
    %8 = vector.load %arg1[%c0_3, %c0_4] : memref<1x128xi32, #tpu.memory_space<vmem>>, vector<1x128xi32>
    %9 = vector.broadcast %8 : vector<1x128xi32> to vector<8x128xi32>
    %10 = arith.cmpi eq, %1, %9 : vector<8x128xi32>
    %11 = arith.extui %10 : vector<8x128xi1> to vector<8x128xi32>
    %12 = arith.sitofp %11 : vector<8x128xi32> to vector<8x128xf32>
    %13 = arith.truncf %12 : vector<8x128xf32> to vector<8x128xbf16>
    %cst = arith.constant dense<0.000000e+00> : vector<8x8xf32>
    %14 = tpu.matmul %7, %13, %cst {dimension_numbers = #tpu.dot_dimension_numbers<[1], [1], [0], [0], [0, 0, 1, 0], [], []>} : vector<8x128xbf16>, vector<8x128xbf16>, vector<8x8xf32> -> vector<8x8xf32>
    %cst_5 = arith.constant 5.000000e-01 : f32
    %15 = vector.broadcast %cst_5 : f32 to vector<8x8xf32>
    %16 = arith.cmpf ogt, %14, %15 : vector<8x8xf32>
    %17 = arith.extui %16 : vector<8x8xi1> to vector<8x8xi32>
    %18 = arith.sitofp %17 : vector<8x8xi32> to vector<8x8xf32>
    %cst_6 = arith.constant 0.000000e+00 : f32
    %cst_7 = arith.constant -1.000000e+30 : f32
    %19 = vector.broadcast %cst_6 : f32 to vector<8x8xf32>
    %20 = vector.broadcast %cst_7 : f32 to vector<8x8xf32>
    %21 = arith.select %16, %19, %20 : vector<8x8xi1>, vector<8x8xf32>
    %cst_8 = arith.constant 0.000000e+00 : f32
    %22 = vector.broadcast %cst_8 : f32 to vector<8x8xf32>
    %c0_9 = arith.constant 0 : index
    %c0_10 = arith.constant 0 : index
    %c0_11 = arith.constant 0 : index
    %23 = vector.load %arg3[%c0_9, %c0_10, %c0_11] : memref<6x128x512xbf16, #tpu.memory_space<vmem>>, vector<1x128x512xbf16>
    %24 = vector.shape_cast %23 : vector<1x128x512xbf16> to vector<128x512xbf16>
    %c0_12 = arith.constant 0 : index
    %c0_13 = arith.constant 0 : index
    %c0_14 = arith.constant 0 : index
    %25 = vector.load %arg4[%c0_12, %c0_13, %c0_14] : memref<6x1x512xf32, #tpu.memory_space<vmem>>, vector<1x1x512xf32>
    %26 = vector.shape_cast %25 : vector<1x1x512xf32> to vector<1x512xf32>
    %27 = arith.truncf %0 : vector<8x128xf32> to vector<8x128xbf16>
    %cst_15 = arith.constant dense<0.000000e+00> : vector<8x512xf32>
    %28 = tpu.matmul %27, %24, %cst_15 {dimension_numbers = #tpu.dot_dimension_numbers<[1], [0], [0], [1], [0, 0, 1, 1], [], []>} : vector<8x128xbf16>, vector<128x512xbf16>, vector<8x512xf32> -> vector<8x512xf32>
    %29 = vector.broadcast %26 : vector<1x512xf32> to vector<8x512xf32>
    %30 = arith.addf %28, %29 : vector<8x512xf32>
    %31 = vector.extract_strided_slice %30 {offsets = [0, 0], sizes = [8, 128], strides = [1, 1]} : vector<8x512xf32> to vector<8x128xf32>
    %32 = vector.extract_strided_slice %30 {offsets = [0, 128], sizes = [8, 128], strides = [1, 1]} : vector<8x512xf32> to vector<8x128xf32>
    %33 = vector.extract_strided_slice %30 {offsets = [0, 256], sizes = [8, 128], strides = [1, 1]} : vector<8x512xf32> to vector<8x128xf32>
    %34 = vector.extract_strided_slice %30 {offsets = [0, 384], sizes = [8, 128], strides = [1, 1]} : vector<8x512xf32> to vector<8x128xf32>
    %35 = arith.truncf %31 : vector<8x128xf32> to vector<8x128xbf16>
    %36 = arith.truncf %32 : vector<8x128xf32> to vector<8x128xbf16>
    %cst_16 = arith.constant dense<0.000000e+00> : vector<8x8xf32>
    %37 = tpu.matmul %35, %36, %cst_16 {dimension_numbers = #tpu.dot_dimension_numbers<[1], [1], [0], [0], [0, 0, 1, 0], [], []>} : vector<8x128xbf16>, vector<8x128xbf16>, vector<8x8xf32> -> vector<8x8xf32>
    %38 = arith.addf %37, %21 : vector<8x8xf32>
    %cst_17 = arith.constant dense<0xFF800000> : vector<8xf32>
    %39 = vector.multi_reduction <maximumf>, %38, %cst_17 [1] : vector<8x8xf32> to vector<8xf32>
    %40 = vector.shape_cast %39 : vector<8xf32> to vector<8x1xf32>
    %41 = vector.broadcast %40 : vector<8x1xf32> to vector<8x8xf32>
    %42 = arith.subf %38, %41 : vector<8x8xf32>
    %43 = math.exp %42 : vector<8x8xf32>
    %44 = arith.mulf %43, %18 : vector<8x8xf32>
    %cst_18 = arith.constant dense<0.000000e+00> : vector<8xf32>
    %45 = vector.multi_reduction <add>, %44, %cst_18 [1] : vector<8x8xf32> to vector<8xf32>
    %46 = vector.shape_cast %45 : vector<8xf32> to vector<8x1xf32>
    %cst_19 = arith.constant 1.000000e-16 : f32
    %47 = vector.broadcast %cst_19 : f32 to vector<8x1xf32>
    %48 = arith.maximumf %46, %47 : vector<8x1xf32>
    %49 = tpu.reciprocal %48 {approx = true} : vector<8x1xf32> -> vector<8x1xf32>
    %50 = vector.broadcast %49 : vector<8x1xf32> to vector<8x8xf32>
    %51 = arith.mulf %44, %50 : vector<8x8xf32>
    %52 = arith.truncf %51 : vector<8x8xf32> to vector<8x8xbf16>
    %53 = arith.truncf %33 : vector<8x128xf32> to vector<8x128xbf16>
    %cst_20 = arith.constant dense<0.000000e+00> : vector<8x128xf32>
    %54 = tpu.matmul %52, %53, %cst_20 {dimension_numbers = #tpu.dot_dimension_numbers<[1], [0], [0], [1], [0, 0, 1, 1], [], []>} : vector<8x8xbf16>, vector<8x128xbf16>, vector<8x128xf32> -> vector<8x128xf32>
    %55 = arith.addf %54, %34 : vector<8x128xf32>
    %c0_21 = arith.constant 0 : index
    %c0_22 = arith.constant 0 : index
    %c0_23 = arith.constant 0 : index
    %56 = vector.load %arg5[%c0_21, %c0_22, %c0_23] : memref<6x2x128xf32, #tpu.memory_space<vmem>>, vector<1x2x128xf32>
    %57 = vector.shape_cast %56 : vector<1x2x128xf32> to vector<2x128xf32>
    %cst_24 = arith.constant dense<0.000000e+00> : vector<128xf32>
    %58 = vector.multi_reduction <add>, %55, %cst_24 [0] : vector<8x128xf32> to vector<128xf32>
    %59 = vector.shape_cast %58 : vector<128xf32> to vector<1x128xf32>
    %60 = arith.mulf %55, %55 : vector<8x128xf32>
    %cst_25 = arith.constant dense<0.000000e+00> : vector<128xf32>
    %61 = vector.multi_reduction <add>, %60, %cst_25 [0] : vector<8x128xf32> to vector<128xf32>
    %62 = vector.shape_cast %61 : vector<128xf32> to vector<1x128xf32>
    %cst_26 = arith.constant 1.250000e-01 : f32
    %63 = vector.broadcast %cst_26 : f32 to vector<1x128xf32>
    %64 = arith.mulf %59, %63 : vector<1x128xf32>
    %cst_27 = arith.constant 1.250000e-01 : f32
    %65 = vector.broadcast %cst_27 : f32 to vector<1x128xf32>
    %66 = arith.mulf %62, %65 : vector<1x128xf32>
    %67 = arith.mulf %64, %64 : vector<1x128xf32>
    %68 = arith.subf %66, %67 : vector<1x128xf32>
    %cst_28 = arith.constant 0.000000e+00 : f32
    %69 = vector.broadcast %cst_28 : f32 to vector<1x128xf32>
    %70 = arith.maximumf %68, %69 : vector<1x128xf32>
    %71 = vector.extract_strided_slice %57 {offsets = [0, 0], sizes = [1, 128], strides = [1, 1]} : vector<2x128xf32> to vector<1x128xf32>
    %cst_29 = arith.constant 9.99999974E-6 : f32
    %72 = vector.broadcast %cst_29 : f32 to vector<1x128xf32>
    %73 = arith.addf %70, %72 : vector<1x128xf32>
    %74 = math.rsqrt %73 : vector<1x128xf32>
    %75 = arith.mulf %71, %74 : vector<1x128xf32>
    %76 = vector.extract_strided_slice %57 {offsets = [1, 0], sizes = [1, 128], strides = [1, 1]} : vector<2x128xf32> to vector<1x128xf32>
    %77 = arith.mulf %64, %75 : vector<1x128xf32>
    %78 = arith.subf %76, %77 : vector<1x128xf32>
    %79 = vector.broadcast %75 : vector<1x128xf32> to vector<8x128xf32>
    %80 = arith.mulf %55, %79 : vector<8x128xf32>
    %81 = vector.broadcast %78 : vector<1x128xf32> to vector<8x128xf32>
    %82 = arith.addf %80, %81 : vector<8x128xf32>
    %cst_30 = arith.constant 0.000000e+00 : f32
    %83 = vector.broadcast %cst_30 : f32 to vector<8x128xf32>
    %84 = arith.maximumf %82, %83 : vector<8x128xf32>
    %c1 = arith.constant 1 : index
    %c0_31 = arith.constant 0 : index
    %c0_32 = arith.constant 0 : index
    %85 = vector.load %arg3[%c1, %c0_31, %c0_32] : memref<6x128x512xbf16, #tpu.memory_space<vmem>>, vector<1x128x512xbf16>
    %86 = vector.shape_cast %85 : vector<1x128x512xbf16> to vector<128x512xbf16>
    %c1_33 = arith.constant 1 : index
    %c0_34 = arith.constant 0 : index
    %c0_35 = arith.constant 0 : index
    %87 = vector.load %arg4[%c1_33, %c0_34, %c0_35] : memref<6x1x512xf32, #tpu.memory_space<vmem>>, vector<1x1x512xf32>
    %88 = vector.shape_cast %87 : vector<1x1x512xf32> to vector<1x512xf32>
    %89 = arith.truncf %84 : vector<8x128xf32> to vector<8x128xbf16>
    %cst_36 = arith.constant dense<0.000000e+00> : vector<8x512xf32>
    %90 = tpu.matmul %89, %86, %cst_36 {dimension_numbers = #tpu.dot_dimension_numbers<[1], [0], [0], [1], [0, 0, 1, 1], [], []>} : vector<8x128xbf16>, vector<128x512xbf16>, vector<8x512xf32> -> vector<8x512xf32>
    %91 = vector.broadcast %88 : vector<1x512xf32> to vector<8x512xf32>
    %92 = arith.addf %90, %91 : vector<8x512xf32>
    %93 = vector.extract_strided_slice %92 {offsets = [0, 0], sizes = [8, 128], strides = [1, 1]} : vector<8x512xf32> to vector<8x128xf32>
    %94 = vector.extract_strided_slice %92 {offsets = [0, 128], sizes = [8, 128], strides = [1, 1]} : vector<8x512xf32> to vector<8x128xf32>
    %95 = vector.extract_strided_slice %92 {offsets = [0, 256], sizes = [8, 128], strides = [1, 1]} : vector<8x512xf32> to vector<8x128xf32>
    %96 = vector.extract_strided_slice %92 {offsets = [0, 384], sizes = [8, 128], strides = [1, 1]} : vector<8x512xf32> to vector<8x128xf32>
    %97 = arith.truncf %93 : vector<8x128xf32> to vector<8x128xbf16>
    %98 = arith.truncf %94 : vector<8x128xf32> to vector<8x128xbf16>
    %cst_37 = arith.constant dense<0.000000e+00> : vector<8x8xf32>
    %99 = tpu.matmul %97, %98, %cst_37 {dimension_numbers = #tpu.dot_dimension_numbers<[1], [1], [0], [0], [0, 0, 1, 0], [], []>} : vector<8x128xbf16>, vector<8x128xbf16>, vector<8x8xf32> -> vector<8x8xf32>
    %100 = arith.addf %99, %21 : vector<8x8xf32>
    %cst_38 = arith.constant dense<0xFF800000> : vector<8xf32>
    %101 = vector.multi_reduction <maximumf>, %100, %cst_38 [1] : vector<8x8xf32> to vector<8xf32>
    %102 = vector.shape_cast %101 : vector<8xf32> to vector<8x1xf32>
    %103 = vector.broadcast %102 : vector<8x1xf32> to vector<8x8xf32>
    %104 = arith.subf %100, %103 : vector<8x8xf32>
    %105 = math.exp %104 : vector<8x8xf32>
    %106 = arith.mulf %105, %18 : vector<8x8xf32>
    %cst_39 = arith.constant dense<0.000000e+00> : vector<8xf32>
    %107 = vector.multi_reduction <add>, %106, %cst_39 [1] : vector<8x8xf32> to vector<8xf32>
    %108 = vector.shape_cast %107 : vector<8xf32> to vector<8x1xf32>
    %cst_40 = arith.constant 1.000000e-16 : f32
    %109 = vector.broadcast %cst_40 : f32 to vector<8x1xf32>
    %110 = arith.maximumf %108, %109 : vector<8x1xf32>
    %111 = tpu.reciprocal %110 {approx = true} : vector<8x1xf32> -> vector<8x1xf32>
    %112 = vector.broadcast %111 : vector<8x1xf32> to vector<8x8xf32>
    %113 = arith.mulf %106, %112 : vector<8x8xf32>
    %114 = arith.truncf %113 : vector<8x8xf32> to vector<8x8xbf16>
    %115 = arith.truncf %95 : vector<8x128xf32> to vector<8x128xbf16>
    %cst_41 = arith.constant dense<0.000000e+00> : vector<8x128xf32>
    %116 = tpu.matmul %114, %115, %cst_41 {dimension_numbers = #tpu.dot_dimension_numbers<[1], [0], [0], [1], [0, 0, 1, 1], [], []>} : vector<8x8xbf16>, vector<8x128xbf16>, vector<8x128xf32> -> vector<8x128xf32>
    %117 = arith.addf %116, %96 : vector<8x128xf32>
    %c1_42 = arith.constant 1 : index
    %c0_43 = arith.constant 0 : index
    %c0_44 = arith.constant 0 : index
    %118 = vector.load %arg5[%c1_42, %c0_43, %c0_44] : memref<6x2x128xf32, #tpu.memory_space<vmem>>, vector<1x2x128xf32>
    %119 = vector.shape_cast %118 : vector<1x2x128xf32> to vector<2x128xf32>
    %cst_45 = arith.constant dense<0.000000e+00> : vector<128xf32>
    %120 = vector.multi_reduction <add>, %117, %cst_45 [0] : vector<8x128xf32> to vector<128xf32>
    %121 = vector.shape_cast %120 : vector<128xf32> to vector<1x128xf32>
    %122 = arith.mulf %117, %117 : vector<8x128xf32>
    %cst_46 = arith.constant dense<0.000000e+00> : vector<128xf32>
    %123 = vector.multi_reduction <add>, %122, %cst_46 [0] : vector<8x128xf32> to vector<128xf32>
    %124 = vector.shape_cast %123 : vector<128xf32> to vector<1x128xf32>
    %cst_47 = arith.constant 1.250000e-01 : f32
    %125 = vector.broadcast %cst_47 : f32 to vector<1x128xf32>
    %126 = arith.mulf %121, %125 : vector<1x128xf32>
    %cst_48 = arith.constant 1.250000e-01 : f32
    %127 = vector.broadcast %cst_48 : f32 to vector<1x128xf32>
    %128 = arith.mulf %124, %127 : vector<1x128xf32>
    %129 = arith.mulf %126, %126 : vector<1x128xf32>
    %130 = arith.subf %128, %129 : vector<1x128xf32>
    %cst_49 = arith.constant 0.000000e+00 : f32
    %131 = vector.broadcast %cst_49 : f32 to vector<1x128xf32>
    %132 = arith.maximumf %130, %131 : vector<1x128xf32>
    %133 = vector.extract_strided_slice %119 {offsets = [0, 0], sizes = [1, 128], strides = [1, 1]} : vector<2x128xf32> to vector<1x128xf32>
    %cst_50 = arith.constant 9.99999974E-6 : f32
    %134 = vector.broadcast %cst_50 : f32 to vector<1x128xf32>
    %135 = arith.addf %132, %134 : vector<1x128xf32>
    %136 = math.rsqrt %135 : vector<1x128xf32>
    %137 = arith.mulf %133, %136 : vector<1x128xf32>
    %138 = vector.extract_strided_slice %119 {offsets = [1, 0], sizes = [1, 128], strides = [1, 1]} : vector<2x128xf32> to vector<1x128xf32>
    %139 = arith.mulf %126, %137 : vector<1x128xf32>
    %140 = arith.subf %138, %139 : vector<1x128xf32>
    %141 = vector.broadcast %137 : vector<1x128xf32> to vector<8x128xf32>
    %142 = arith.mulf %117, %141 : vector<8x128xf32>
    %143 = vector.broadcast %140 : vector<1x128xf32> to vector<8x128xf32>
    %144 = arith.addf %142, %143 : vector<8x128xf32>
    %145 = arith.addf %144, %0 : vector<8x128xf32>
    %cst_51 = arith.constant 0.000000e+00 : f32
    %146 = vector.broadcast %cst_51 : f32 to vector<8x128xf32>
    %147 = arith.maximumf %145, %146 : vector<8x128xf32>
    %148 = arith.addf %22, %51 : vector<8x8xf32>
    %149 = arith.addf %148, %113 : vector<8x8xf32>
    %c2 = arith.constant 2 : index
    %c0_52 = arith.constant 0 : index
    %c0_53 = arith.constant 0 : index
    %150 = vector.load %arg3[%c2, %c0_52, %c0_53] : memref<6x128x512xbf16, #tpu.memory_space<vmem>>, vector<1x128x512xbf16>
    %151 = vector.shape_cast %150 : vector<1x128x512xbf16> to vector<128x512xbf16>
    %c2_54 = arith.constant 2 : index
    %c0_55 = arith.constant 0 : index
    %c0_56 = arith.constant 0 : index
    %152 = vector.load %arg4[%c2_54, %c0_55, %c0_56] : memref<6x1x512xf32, #tpu.memory_space<vmem>>, vector<1x1x512xf32>
    %153 = vector.shape_cast %152 : vector<1x1x512xf32> to vector<1x512xf32>
    %154 = arith.truncf %147 : vector<8x128xf32> to vector<8x128xbf16>
    %cst_57 = arith.constant dense<0.000000e+00> : vector<8x512xf32>
    %155 = tpu.matmul %154, %151, %cst_57 {dimension_numbers = #tpu.dot_dimension_numbers<[1], [0], [0], [1], [0, 0, 1, 1], [], []>} : vector<8x128xbf16>, vector<128x512xbf16>, vector<8x512xf32> -> vector<8x512xf32>
    %156 = vector.broadcast %153 : vector<1x512xf32> to vector<8x512xf32>
    %157 = arith.addf %155, %156 : vector<8x512xf32>
    %158 = vector.extract_strided_slice %157 {offsets = [0, 0], sizes = [8, 128], strides = [1, 1]} : vector<8x512xf32> to vector<8x128xf32>
    %159 = vector.extract_strided_slice %157 {offsets = [0, 128], sizes = [8, 128], strides = [1, 1]} : vector<8x512xf32> to vector<8x128xf32>
    %160 = vector.extract_strided_slice %157 {offsets = [0, 256], sizes = [8, 128], strides = [1, 1]} : vector<8x512xf32> to vector<8x128xf32>
    %161 = vector.extract_strided_slice %157 {offsets = [0, 384], sizes = [8, 128], strides = [1, 1]} : vector<8x512xf32> to vector<8x128xf32>
    %162 = arith.truncf %158 : vector<8x128xf32> to vector<8x128xbf16>
    %163 = arith.truncf %159 : vector<8x128xf32> to vector<8x128xbf16>
    %cst_58 = arith.constant dense<0.000000e+00> : vector<8x8xf32>
    %164 = tpu.matmul %162, %163, %cst_58 {dimension_numbers = #tpu.dot_dimension_numbers<[1], [1], [0], [0], [0, 0, 1, 0], [], []>} : vector<8x128xbf16>, vector<8x128xbf16>, vector<8x8xf32> -> vector<8x8xf32>
    %165 = arith.addf %164, %21 : vector<8x8xf32>
    %cst_59 = arith.constant dense<0xFF800000> : vector<8xf32>
    %166 = vector.multi_reduction <maximumf>, %165, %cst_59 [1] : vector<8x8xf32> to vector<8xf32>
    %167 = vector.shape_cast %166 : vector<8xf32> to vector<8x1xf32>
    %168 = vector.broadcast %167 : vector<8x1xf32> to vector<8x8xf32>
    %169 = arith.subf %165, %168 : vector<8x8xf32>
    %170 = math.exp %169 : vector<8x8xf32>
    %171 = arith.mulf %170, %18 : vector<8x8xf32>
    %cst_60 = arith.constant dense<0.000000e+00> : vector<8xf32>
    %172 = vector.multi_reduction <add>, %171, %cst_60 [1] : vector<8x8xf32> to vector<8xf32>
    %173 = vector.shape_cast %172 : vector<8xf32> to vector<8x1xf32>
    %cst_61 = arith.constant 1.000000e-16 : f32
    %174 = vector.broadcast %cst_61 : f32 to vector<8x1xf32>
    %175 = arith.maximumf %173, %174 : vector<8x1xf32>
    %176 = tpu.reciprocal %175 {approx = true} : vector<8x1xf32> -> vector<8x1xf32>
    %177 = vector.broadcast %176 : vector<8x1xf32> to vector<8x8xf32>
    %178 = arith.mulf %171, %177 : vector<8x8xf32>
    %179 = arith.truncf %178 : vector<8x8xf32> to vector<8x8xbf16>
    %180 = arith.truncf %160 : vector<8x128xf32> to vector<8x128xbf16>
    %cst_62 = arith.constant dense<0.000000e+00> : vector<8x128xf32>
    %181 = tpu.matmul %179, %180, %cst_62 {dimension_numbers = #tpu.dot_dimension_numbers<[1], [0], [0], [1], [0, 0, 1, 1], [], []>} : vector<8x8xbf16>, vector<8x128xbf16>, vector<8x128xf32> -> vector<8x128xf32>
    %182 = arith.addf %181, %161 : vector<8x128xf32>
    %c2_63 = arith.constant 2 : index
    %c0_64 = arith.constant 0 : index
    %c0_65 = arith.constant 0 : index
    %183 = vector.load %arg5[%c2_63, %c0_64, %c0_65] : memref<6x2x128xf32, #tpu.memory_space<vmem>>, vector<1x2x128xf32>
    %184 = vector.shape_cast %183 : vector<1x2x128xf32> to vector<2x128xf32>
    %cst_66 = arith.constant dense<0.000000e+00> : vector<128xf32>
    %185 = vector.multi_reduction <add>, %182, %cst_66 [0] : vector<8x128xf32> to vector<128xf32>
    %186 = vector.shape_cast %185 : vector<128xf32> to vector<1x128xf32>
    %187 = arith.mulf %182, %182 : vector<8x128xf32>
    %cst_67 = arith.constant dense<0.000000e+00> : vector<128xf32>
    %188 = vector.multi_reduction <add>, %187, %cst_67 [0] : vector<8x128xf32> to vector<128xf32>
    %189 = vector.shape_cast %188 : vector<128xf32> to vector<1x128xf32>
    %cst_68 = arith.constant 1.250000e-01 : f32
    %190 = vector.broadcast %cst_68 : f32 to vector<1x128xf32>
    %191 = arith.mulf %186, %190 : vector<1x128xf32>
    %cst_69 = arith.constant 1.250000e-01 : f32
    %192 = vector.broadcast %cst_69 : f32 to vector<1x128xf32>
    %193 = arith.mulf %189, %192 : vector<1x128xf32>
    %194 = arith.mulf %191, %191 : vector<1x128xf32>
    %195 = arith.subf %193, %194 : vector<1x128xf32>
    %cst_70 = arith.constant 0.000000e+00 : f32
    %196 = vector.broadcast %cst_70 : f32 to vector<1x128xf32>
    %197 = arith.maximumf %195, %196 : vector<1x128xf32>
    %198 = vector.extract_strided_slice %184 {offsets = [0, 0], sizes = [1, 128], strides = [1, 1]} : vector<2x128xf32> to vector<1x128xf32>
    %cst_71 = arith.constant 9.99999974E-6 : f32
    %199 = vector.broadcast %cst_71 : f32 to vector<1x128xf32>
    %200 = arith.addf %197, %199 : vector<1x128xf32>
    %201 = math.rsqrt %200 : vector<1x128xf32>
    %202 = arith.mulf %198, %201 : vector<1x128xf32>
    %203 = vector.extract_strided_slice %184 {offsets = [1, 0], sizes = [1, 128], strides = [1, 1]} : vector<2x128xf32> to vector<1x128xf32>
    %204 = arith.mulf %191, %202 : vector<1x128xf32>
    %205 = arith.subf %203, %204 : vector<1x128xf32>
    %206 = vector.broadcast %202 : vector<1x128xf32> to vector<8x128xf32>
    %207 = arith.mulf %182, %206 : vector<8x128xf32>
    %208 = vector.broadcast %205 : vector<1x128xf32> to vector<8x128xf32>
    %209 = arith.addf %207, %208 : vector<8x128xf32>
    %cst_72 = arith.constant 0.000000e+00 : f32
    %210 = vector.broadcast %cst_72 : f32 to vector<8x128xf32>
    %211 = arith.maximumf %209, %210 : vector<8x128xf32>
    %c3 = arith.constant 3 : index
    %c0_73 = arith.constant 0 : index
    %c0_74 = arith.constant 0 : index
    %212 = vector.load %arg3[%c3, %c0_73, %c0_74] : memref<6x128x512xbf16, #tpu.memory_space<vmem>>, vector<1x128x512xbf16>
    %213 = vector.shape_cast %212 : vector<1x128x512xbf16> to vector<128x512xbf16>
    %c3_75 = arith.constant 3 : index
    %c0_76 = arith.constant 0 : index
    %c0_77 = arith.constant 0 : index
    %214 = vector.load %arg4[%c3_75, %c0_76, %c0_77] : memref<6x1x512xf32, #tpu.memory_space<vmem>>, vector<1x1x512xf32>
    %215 = vector.shape_cast %214 : vector<1x1x512xf32> to vector<1x512xf32>
    %216 = arith.truncf %211 : vector<8x128xf32> to vector<8x128xbf16>
    %cst_78 = arith.constant dense<0.000000e+00> : vector<8x512xf32>
    %217 = tpu.matmul %216, %213, %cst_78 {dimension_numbers = #tpu.dot_dimension_numbers<[1], [0], [0], [1], [0, 0, 1, 1], [], []>} : vector<8x128xbf16>, vector<128x512xbf16>, vector<8x512xf32> -> vector<8x512xf32>
    %218 = vector.broadcast %215 : vector<1x512xf32> to vector<8x512xf32>
    %219 = arith.addf %217, %218 : vector<8x512xf32>
    %220 = vector.extract_strided_slice %219 {offsets = [0, 0], sizes = [8, 128], strides = [1, 1]} : vector<8x512xf32> to vector<8x128xf32>
    %221 = vector.extract_strided_slice %219 {offsets = [0, 128], sizes = [8, 128], strides = [1, 1]} : vector<8x512xf32> to vector<8x128xf32>
    %222 = vector.extract_strided_slice %219 {offsets = [0, 256], sizes = [8, 128], strides = [1, 1]} : vector<8x512xf32> to vector<8x128xf32>
    %223 = vector.extract_strided_slice %219 {offsets = [0, 384], sizes = [8, 128], strides = [1, 1]} : vector<8x512xf32> to vector<8x128xf32>
    %224 = arith.truncf %220 : vector<8x128xf32> to vector<8x128xbf16>
    %225 = arith.truncf %221 : vector<8x128xf32> to vector<8x128xbf16>
    %cst_79 = arith.constant dense<0.000000e+00> : vector<8x8xf32>
    %226 = tpu.matmul %224, %225, %cst_79 {dimension_numbers = #tpu.dot_dimension_numbers<[1], [1], [0], [0], [0, 0, 1, 0], [], []>} : vector<8x128xbf16>, vector<8x128xbf16>, vector<8x8xf32> -> vector<8x8xf32>
    %227 = arith.addf %226, %21 : vector<8x8xf32>
    %cst_80 = arith.constant dense<0xFF800000> : vector<8xf32>
    %228 = vector.multi_reduction <maximumf>, %227, %cst_80 [1] : vector<8x8xf32> to vector<8xf32>
    %229 = vector.shape_cast %228 : vector<8xf32> to vector<8x1xf32>
    %230 = vector.broadcast %229 : vector<8x1xf32> to vector<8x8xf32>
    %231 = arith.subf %227, %230 : vector<8x8xf32>
    %232 = math.exp %231 : vector<8x8xf32>
    %233 = arith.mulf %232, %18 : vector<8x8xf32>
    %cst_81 = arith.constant dense<0.000000e+00> : vector<8xf32>
    %234 = vector.multi_reduction <add>, %233, %cst_81 [1] : vector<8x8xf32> to vector<8xf32>
    %235 = vector.shape_cast %234 : vector<8xf32> to vector<8x1xf32>
    %cst_82 = arith.constant 1.000000e-16 : f32
    %236 = vector.broadcast %cst_82 : f32 to vector<8x1xf32>
    %237 = arith.maximumf %235, %236 : vector<8x1xf32>
    %238 = tpu.reciprocal %237 {approx = true} : vector<8x1xf32> -> vector<8x1xf32>
    %239 = vector.broadcast %238 : vector<8x1xf32> to vector<8x8xf32>
    %240 = arith.mulf %233, %239 : vector<8x8xf32>
    %241 = arith.truncf %240 : vector<8x8xf32> to vector<8x8xbf16>
    %242 = arith.truncf %222 : vector<8x128xf32> to vector<8x128xbf16>
    %cst_83 = arith.constant dense<0.000000e+00> : vector<8x128xf32>
    %243 = tpu.matmul %241, %242, %cst_83 {dimension_numbers = #tpu.dot_dimension_numbers<[1], [0], [0], [1], [0, 0, 1, 1], [], []>} : vector<8x8xbf16>, vector<8x128xbf16>, vector<8x128xf32> -> vector<8x128xf32>
    %244 = arith.addf %243, %223 : vector<8x128xf32>
    %c3_84 = arith.constant 3 : index
    %c0_85 = arith.constant 0 : index
    %c0_86 = arith.constant 0 : index
    %245 = vector.load %arg5[%c3_84, %c0_85, %c0_86] : memref<6x2x128xf32, #tpu.memory_space<vmem>>, vector<1x2x128xf32>
    %246 = vector.shape_cast %245 : vector<1x2x128xf32> to vector<2x128xf32>
    %cst_87 = arith.constant dense<0.000000e+00> : vector<128xf32>
    %247 = vector.multi_reduction <add>, %244, %cst_87 [0] : vector<8x128xf32> to vector<128xf32>
    %248 = vector.shape_cast %247 : vector<128xf32> to vector<1x128xf32>
    %249 = arith.mulf %244, %244 : vector<8x128xf32>
    %cst_88 = arith.constant dense<0.000000e+00> : vector<128xf32>
    %250 = vector.multi_reduction <add>, %249, %cst_88 [0] : vector<8x128xf32> to vector<128xf32>
    %251 = vector.shape_cast %250 : vector<128xf32> to vector<1x128xf32>
    %cst_89 = arith.constant 1.250000e-01 : f32
    %252 = vector.broadcast %cst_89 : f32 to vector<1x128xf32>
    %253 = arith.mulf %248, %252 : vector<1x128xf32>
    %cst_90 = arith.constant 1.250000e-01 : f32
    %254 = vector.broadcast %cst_90 : f32 to vector<1x128xf32>
    %255 = arith.mulf %251, %254 : vector<1x128xf32>
    %256 = arith.mulf %253, %253 : vector<1x128xf32>
    %257 = arith.subf %255, %256 : vector<1x128xf32>
    %cst_91 = arith.constant 0.000000e+00 : f32
    %258 = vector.broadcast %cst_91 : f32 to vector<1x128xf32>
    %259 = arith.maximumf %257, %258 : vector<1x128xf32>
    %260 = vector.extract_strided_slice %246 {offsets = [0, 0], sizes = [1, 128], strides = [1, 1]} : vector<2x128xf32> to vector<1x128xf32>
    %cst_92 = arith.constant 9.99999974E-6 : f32
    %261 = vector.broadcast %cst_92 : f32 to vector<1x128xf32>
    %262 = arith.addf %259, %261 : vector<1x128xf32>
    %263 = math.rsqrt %262 : vector<1x128xf32>
    %264 = arith.mulf %260, %263 : vector<1x128xf32>
    %265 = vector.extract_strided_slice %246 {offsets = [1, 0], sizes = [1, 128], strides = [1, 1]} : vector<2x128xf32> to vector<1x128xf32>
    %266 = arith.mulf %253, %264 : vector<1x128xf32>
    %267 = arith.subf %265, %266 : vector<1x128xf32>
    %268 = vector.broadcast %264 : vector<1x128xf32> to vector<8x128xf32>
    %269 = arith.mulf %244, %268 : vector<8x128xf32>
    %270 = vector.broadcast %267 : vector<1x128xf32> to vector<8x128xf32>
    %271 = arith.addf %269, %270 : vector<8x128xf32>
    %272 = arith.addf %271, %147 : vector<8x128xf32>
    %cst_93 = arith.constant 0.000000e+00 : f32
    %273 = vector.broadcast %cst_93 : f32 to vector<8x128xf32>
    %274 = arith.maximumf %272, %273 : vector<8x128xf32>
    %275 = arith.addf %149, %178 : vector<8x8xf32>
    %276 = arith.addf %275, %240 : vector<8x8xf32>
    %c4 = arith.constant 4 : index
    %c0_94 = arith.constant 0 : index
    %c0_95 = arith.constant 0 : index
    %277 = vector.load %arg3[%c4, %c0_94, %c0_95] : memref<6x128x512xbf16, #tpu.memory_space<vmem>>, vector<1x128x512xbf16>
    %278 = vector.shape_cast %277 : vector<1x128x512xbf16> to vector<128x512xbf16>
    %c4_96 = arith.constant 4 : index
    %c0_97 = arith.constant 0 : index
    %c0_98 = arith.constant 0 : index
    %279 = vector.load %arg4[%c4_96, %c0_97, %c0_98] : memref<6x1x512xf32, #tpu.memory_space<vmem>>, vector<1x1x512xf32>
    %280 = vector.shape_cast %279 : vector<1x1x512xf32> to vector<1x512xf32>
    %281 = arith.truncf %274 : vector<8x128xf32> to vector<8x128xbf16>
    %cst_99 = arith.constant dense<0.000000e+00> : vector<8x512xf32>
    %282 = tpu.matmul %281, %278, %cst_99 {dimension_numbers = #tpu.dot_dimension_numbers<[1], [0], [0], [1], [0, 0, 1, 1], [], []>} : vector<8x128xbf16>, vector<128x512xbf16>, vector<8x512xf32> -> vector<8x512xf32>
    %283 = vector.broadcast %280 : vector<1x512xf32> to vector<8x512xf32>
    %284 = arith.addf %282, %283 : vector<8x512xf32>
    %285 = vector.extract_strided_slice %284 {offsets = [0, 0], sizes = [8, 128], strides = [1, 1]} : vector<8x512xf32> to vector<8x128xf32>
    %286 = vector.extract_strided_slice %284 {offsets = [0, 128], sizes = [8, 128], strides = [1, 1]} : vector<8x512xf32> to vector<8x128xf32>
    %287 = vector.extract_strided_slice %284 {offsets = [0, 256], sizes = [8, 128], strides = [1, 1]} : vector<8x512xf32> to vector<8x128xf32>
    %288 = vector.extract_strided_slice %284 {offsets = [0, 384], sizes = [8, 128], strides = [1, 1]} : vector<8x512xf32> to vector<8x128xf32>
    %289 = arith.truncf %285 : vector<8x128xf32> to vector<8x128xbf16>
    %290 = arith.truncf %286 : vector<8x128xf32> to vector<8x128xbf16>
    %cst_100 = arith.constant dense<0.000000e+00> : vector<8x8xf32>
    %291 = tpu.matmul %289, %290, %cst_100 {dimension_numbers = #tpu.dot_dimension_numbers<[1], [1], [0], [0], [0, 0, 1, 0], [], []>} : vector<8x128xbf16>, vector<8x128xbf16>, vector<8x8xf32> -> vector<8x8xf32>
    %292 = arith.addf %291, %21 : vector<8x8xf32>
    %cst_101 = arith.constant dense<0xFF800000> : vector<8xf32>
    %293 = vector.multi_reduction <maximumf>, %292, %cst_101 [1] : vector<8x8xf32> to vector<8xf32>
    %294 = vector.shape_cast %293 : vector<8xf32> to vector<8x1xf32>
    %295 = vector.broadcast %294 : vector<8x1xf32> to vector<8x8xf32>
    %296 = arith.subf %292, %295 : vector<8x8xf32>
    %297 = math.exp %296 : vector<8x8xf32>
    %298 = arith.mulf %297, %18 : vector<8x8xf32>
    %cst_102 = arith.constant dense<0.000000e+00> : vector<8xf32>
    %299 = vector.multi_reduction <add>, %298, %cst_102 [1] : vector<8x8xf32> to vector<8xf32>
    %300 = vector.shape_cast %299 : vector<8xf32> to vector<8x1xf32>
    %cst_103 = arith.constant 1.000000e-16 : f32
    %301 = vector.broadcast %cst_103 : f32 to vector<8x1xf32>
    %302 = arith.maximumf %300, %301 : vector<8x1xf32>
    %303 = tpu.reciprocal %302 {approx = true} : vector<8x1xf32> -> vector<8x1xf32>
    %304 = vector.broadcast %303 : vector<8x1xf32> to vector<8x8xf32>
    %305 = arith.mulf %298, %304 : vector<8x8xf32>
    %306 = arith.truncf %305 : vector<8x8xf32> to vector<8x8xbf16>
    %307 = arith.truncf %287 : vector<8x128xf32> to vector<8x128xbf16>
    %cst_104 = arith.constant dense<0.000000e+00> : vector<8x128xf32>
    %308 = tpu.matmul %306, %307, %cst_104 {dimension_numbers = #tpu.dot_dimension_numbers<[1], [0], [0], [1], [0, 0, 1, 1], [], []>} : vector<8x8xbf16>, vector<8x128xbf16>, vector<8x128xf32> -> vector<8x128xf32>
    %309 = arith.addf %308, %288 : vector<8x128xf32>
    %c4_105 = arith.constant 4 : index
    %c0_106 = arith.constant 0 : index
    %c0_107 = arith.constant 0 : index
    %310 = vector.load %arg5[%c4_105, %c0_106, %c0_107] : memref<6x2x128xf32, #tpu.memory_space<vmem>>, vector<1x2x128xf32>
    %311 = vector.shape_cast %310 : vector<1x2x128xf32> to vector<2x128xf32>
    %cst_108 = arith.constant dense<0.000000e+00> : vector<128xf32>
    %312 = vector.multi_reduction <add>, %309, %cst_108 [0] : vector<8x128xf32> to vector<128xf32>
    %313 = vector.shape_cast %312 : vector<128xf32> to vector<1x128xf32>
    %314 = arith.mulf %309, %309 : vector<8x128xf32>
    %cst_109 = arith.constant dense<0.000000e+00> : vector<128xf32>
    %315 = vector.multi_reduction <add>, %314, %cst_109 [0] : vector<8x128xf32> to vector<128xf32>
    %316 = vector.shape_cast %315 : vector<128xf32> to vector<1x128xf32>
    %cst_110 = arith.constant 1.250000e-01 : f32
    %317 = vector.broadcast %cst_110 : f32 to vector<1x128xf32>
    %318 = arith.mulf %313, %317 : vector<1x128xf32>
    %cst_111 = arith.constant 1.250000e-01 : f32
    %319 = vector.broadcast %cst_111 : f32 to vector<1x128xf32>
    %320 = arith.mulf %316, %319 : vector<1x128xf32>
    %321 = arith.mulf %318, %318 : vector<1x128xf32>
    %322 = arith.subf %320, %321 : vector<1x128xf32>
    %cst_112 = arith.constant 0.000000e+00 : f32
    %323 = vector.broadcast %cst_112 : f32 to vector<1x128xf32>
    %324 = arith.maximumf %322, %323 : vector<1x128xf32>
    %325 = vector.extract_strided_slice %311 {offsets = [0, 0], sizes = [1, 128], strides = [1, 1]} : vector<2x128xf32> to vector<1x128xf32>
    %cst_113 = arith.constant 9.99999974E-6 : f32
    %326 = vector.broadcast %cst_113 : f32 to vector<1x128xf32>
    %327 = arith.addf %324, %326 : vector<1x128xf32>
    %328 = math.rsqrt %327 : vector<1x128xf32>
    %329 = arith.mulf %325, %328 : vector<1x128xf32>
    %330 = vector.extract_strided_slice %311 {offsets = [1, 0], sizes = [1, 128], strides = [1, 1]} : vector<2x128xf32> to vector<1x128xf32>
    %331 = arith.mulf %318, %329 : vector<1x128xf32>
    %332 = arith.subf %330, %331 : vector<1x128xf32>
    %333 = vector.broadcast %329 : vector<1x128xf32> to vector<8x128xf32>
    %334 = arith.mulf %309, %333 : vector<8x128xf32>
    %335 = vector.broadcast %332 : vector<1x128xf32> to vector<8x128xf32>
    %336 = arith.addf %334, %335 : vector<8x128xf32>
    %cst_114 = arith.constant 0.000000e+00 : f32
    %337 = vector.broadcast %cst_114 : f32 to vector<8x128xf32>
    %338 = arith.maximumf %336, %337 : vector<8x128xf32>
    %c5 = arith.constant 5 : index
    %c0_115 = arith.constant 0 : index
    %c0_116 = arith.constant 0 : index
    %339 = vector.load %arg3[%c5, %c0_115, %c0_116] : memref<6x128x512xbf16, #tpu.memory_space<vmem>>, vector<1x128x512xbf16>
    %340 = vector.shape_cast %339 : vector<1x128x512xbf16> to vector<128x512xbf16>
    %c5_117 = arith.constant 5 : index
    %c0_118 = arith.constant 0 : index
    %c0_119 = arith.constant 0 : index
    %341 = vector.load %arg4[%c5_117, %c0_118, %c0_119] : memref<6x1x512xf32, #tpu.memory_space<vmem>>, vector<1x1x512xf32>
    %342 = vector.shape_cast %341 : vector<1x1x512xf32> to vector<1x512xf32>
    %343 = arith.truncf %338 : vector<8x128xf32> to vector<8x128xbf16>
    %cst_120 = arith.constant dense<0.000000e+00> : vector<8x512xf32>
    %344 = tpu.matmul %343, %340, %cst_120 {dimension_numbers = #tpu.dot_dimension_numbers<[1], [0], [0], [1], [0, 0, 1, 1], [], []>} : vector<8x128xbf16>, vector<128x512xbf16>, vector<8x512xf32> -> vector<8x512xf32>
    %345 = vector.broadcast %342 : vector<1x512xf32> to vector<8x512xf32>
    %346 = arith.addf %344, %345 : vector<8x512xf32>
    %347 = vector.extract_strided_slice %346 {offsets = [0, 0], sizes = [8, 128], strides = [1, 1]} : vector<8x512xf32> to vector<8x128xf32>
    %348 = vector.extract_strided_slice %346 {offsets = [0, 128], sizes = [8, 128], strides = [1, 1]} : vector<8x512xf32> to vector<8x128xf32>
    %349 = vector.extract_strided_slice %346 {offsets = [0, 256], sizes = [8, 128], strides = [1, 1]} : vector<8x512xf32> to vector<8x128xf32>
    %350 = vector.extract_strided_slice %346 {offsets = [0, 384], sizes = [8, 128], strides = [1, 1]} : vector<8x512xf32> to vector<8x128xf32>
    %351 = arith.truncf %347 : vector<8x128xf32> to vector<8x128xbf16>
    %352 = arith.truncf %348 : vector<8x128xf32> to vector<8x128xbf16>
    %cst_121 = arith.constant dense<0.000000e+00> : vector<8x8xf32>
    %353 = tpu.matmul %351, %352, %cst_121 {dimension_numbers = #tpu.dot_dimension_numbers<[1], [1], [0], [0], [0, 0, 1, 0], [], []>} : vector<8x128xbf16>, vector<8x128xbf16>, vector<8x8xf32> -> vector<8x8xf32>
    %354 = arith.addf %353, %21 : vector<8x8xf32>
    %cst_122 = arith.constant dense<0xFF800000> : vector<8xf32>
    %355 = vector.multi_reduction <maximumf>, %354, %cst_122 [1] : vector<8x8xf32> to vector<8xf32>
    %356 = vector.shape_cast %355 : vector<8xf32> to vector<8x1xf32>
    %357 = vector.broadcast %356 : vector<8x1xf32> to vector<8x8xf32>
    %358 = arith.subf %354, %357 : vector<8x8xf32>
    %359 = math.exp %358 : vector<8x8xf32>
    %360 = arith.mulf %359, %18 : vector<8x8xf32>
    %cst_123 = arith.constant dense<0.000000e+00> : vector<8xf32>
    %361 = vector.multi_reduction <add>, %360, %cst_123 [1] : vector<8x8xf32> to vector<8xf32>
    %362 = vector.shape_cast %361 : vector<8xf32> to vector<8x1xf32>
    %cst_124 = arith.constant 1.000000e-16 : f32
    %363 = vector.broadcast %cst_124 : f32 to vector<8x1xf32>
    %364 = arith.maximumf %362, %363 : vector<8x1xf32>
    %365 = tpu.reciprocal %364 {approx = true} : vector<8x1xf32> -> vector<8x1xf32>
    %366 = vector.broadcast %365 : vector<8x1xf32> to vector<8x8xf32>
    %367 = arith.mulf %360, %366 : vector<8x8xf32>
    %368 = arith.truncf %367 : vector<8x8xf32> to vector<8x8xbf16>
    %369 = arith.truncf %349 : vector<8x128xf32> to vector<8x128xbf16>
    %cst_125 = arith.constant dense<0.000000e+00> : vector<8x128xf32>
    %370 = tpu.matmul %368, %369, %cst_125 {dimension_numbers = #tpu.dot_dimension_numbers<[1], [0], [0], [1], [0, 0, 1, 1], [], []>} : vector<8x8xbf16>, vector<8x128xbf16>, vector<8x128xf32> -> vector<8x128xf32>
    %371 = arith.addf %370, %350 : vector<8x128xf32>
    %c5_126 = arith.constant 5 : index
    %c0_127 = arith.constant 0 : index
    %c0_128 = arith.constant 0 : index
    %372 = vector.load %arg5[%c5_126, %c0_127, %c0_128] : memref<6x2x128xf32, #tpu.memory_space<vmem>>, vector<1x2x128xf32>
    %373 = vector.shape_cast %372 : vector<1x2x128xf32> to vector<2x128xf32>
    %cst_129 = arith.constant dense<0.000000e+00> : vector<128xf32>
    %374 = vector.multi_reduction <add>, %371, %cst_129 [0] : vector<8x128xf32> to vector<128xf32>
    %375 = vector.shape_cast %374 : vector<128xf32> to vector<1x128xf32>
    %376 = arith.mulf %371, %371 : vector<8x128xf32>
    %cst_130 = arith.constant dense<0.000000e+00> : vector<128xf32>
    %377 = vector.multi_reduction <add>, %376, %cst_130 [0] : vector<8x128xf32> to vector<128xf32>
    %378 = vector.shape_cast %377 : vector<128xf32> to vector<1x128xf32>
    %cst_131 = arith.constant 1.250000e-01 : f32
    %379 = vector.broadcast %cst_131 : f32 to vector<1x128xf32>
    %380 = arith.mulf %375, %379 : vector<1x128xf32>
    %cst_132 = arith.constant 1.250000e-01 : f32
    %381 = vector.broadcast %cst_132 : f32 to vector<1x128xf32>
    %382 = arith.mulf %378, %381 : vector<1x128xf32>
    %383 = arith.mulf %380, %380 : vector<1x128xf32>
    %384 = arith.subf %382, %383 : vector<1x128xf32>
    %cst_133 = arith.constant 0.000000e+00 : f32
    %385 = vector.broadcast %cst_133 : f32 to vector<1x128xf32>
    %386 = arith.maximumf %384, %385 : vector<1x128xf32>
    %387 = vector.extract_strided_slice %373 {offsets = [0, 0], sizes = [1, 128], strides = [1, 1]} : vector<2x128xf32> to vector<1x128xf32>
    %cst_134 = arith.constant 9.99999974E-6 : f32
    %388 = vector.broadcast %cst_134 : f32 to vector<1x128xf32>
    %389 = arith.addf %386, %388 : vector<1x128xf32>
    %390 = math.rsqrt %389 : vector<1x128xf32>
    %391 = arith.mulf %387, %390 : vector<1x128xf32>
    %392 = vector.extract_strided_slice %373 {offsets = [1, 0], sizes = [1, 128], strides = [1, 1]} : vector<2x128xf32> to vector<1x128xf32>
    %393 = arith.mulf %380, %391 : vector<1x128xf32>
    %394 = arith.subf %392, %393 : vector<1x128xf32>
    %395 = vector.broadcast %391 : vector<1x128xf32> to vector<8x128xf32>
    %396 = arith.mulf %371, %395 : vector<8x128xf32>
    %397 = vector.broadcast %394 : vector<1x128xf32> to vector<8x128xf32>
    %398 = arith.addf %396, %397 : vector<8x128xf32>
    %399 = arith.addf %398, %274 : vector<8x128xf32>
    %cst_135 = arith.constant 0.000000e+00 : f32
    %400 = vector.broadcast %cst_135 : f32 to vector<8x128xf32>
    %401 = arith.maximumf %399, %400 : vector<8x128xf32>
    %402 = arith.addf %276, %305 : vector<8x8xf32>
    %403 = arith.addf %402, %367 : vector<8x8xf32>
    %c0_136 = arith.constant 0 : index
    %c0_137 = arith.constant 0 : index
    %404 = vector.load %arg6[%c0_136, %c0_137] : memref<8x128xf32, #tpu.memory_space<vmem>>, vector<8x128xf32>
    tpu.vector_store %arg6[%c0_136, %c0_137], %401 {strides = array<i32>} : memref<8x128xf32, #tpu.memory_space<vmem>>, vector<8x128xf32>,
    %405 = arith.truncf %403 : vector<8x8xf32> to vector<8x8xbf16>
    %cst_138 = arith.constant dense<0.000000e+00> : vector<8x128xf32>
    %406 = tpu.matmul %405, %13, %cst_138 {dimension_numbers = #tpu.dot_dimension_numbers<[1], [0], [0], [1], [0, 0, 1, 1], [], []>} : vector<8x8xbf16>, vector<8x128xbf16>, vector<8x128xf32> -> vector<8x128xf32>
    %407 = arith.extf %7 : vector<8x128xbf16> to vector<8x128xf32>
    %408 = arith.mulf %407, %406 : vector<8x128xf32>
    %cst_139 = arith.constant dense<0.000000e+00> : vector<128xf32>
    %409 = vector.multi_reduction <add>, %408, %cst_139 [0] : vector<8x128xf32> to vector<128xf32>
    %410 = vector.shape_cast %409 : vector<128xf32> to vector<1x128xf32>
    %c0_140 = arith.constant 0 : index
    %c0_141 = arith.constant 0 : index
    %411 = vector.load %arg7[%c0_140, %c0_141] : memref<1x128xf32, #tpu.memory_space<vmem>>, vector<1x128xf32>
    tpu.vector_store %arg7[%c0_140, %c0_141], %410 {strides = array<i32>} : memref<1x128xf32, #tpu.memory_space<vmem>>, vector<1x128xf32>,
    return
  }
}

</mosaic_0001>

<llo_original>
// kernel: gnn_layer.1
$region0: #{gnn_layer.1}
  #allocation0 [shape = 'u32[]', space=smem, size = 0x4, offset = 0x4, fixed_abs, tag = 'smem constant byte address 0x4 - core index']
  #allocation1 [shape = 'u32[72,128]{1,0:T(1,128)}', space=vmem, size = 0x9000, scoped, tag = 'internal scratch']
  %s0 = inlined_call_operand.vmem [shape: f32[8,128], index: 0, kind: input, shape index: {}, may-alias: {0,6}]
  %s1 = inlined_call_operand.vmem [shape: s32[1,128], index: 1, kind: input, shape index: {}]
  %s2 = inlined_call_operand.vmem [shape: s32[1,128], index: 2, kind: input, shape index: {}]
  %s3 = inlined_call_operand.vmem [shape: bf16[6,128,512], index: 3, kind: input, shape index: {}]
  %s4 = inlined_call_operand.vmem [shape: f32[6,1,512], index: 4, kind: input, shape index: {}]
  %s5 = inlined_call_operand.vmem [shape: f32[6,2,128], index: 5, kind: input, shape index: {}]
  %s6 = inlined_call_operand.vmem [shape: f32[8,128], index: 6, kind: output, shape index: {0}, may-alias: {0,6}]
  %s7 = inlined_call_operand.vmem [shape: f32[1,128], index: 7, kind: output, shape index: {1}]
  %8 = xla_tuple %s6, %s7
  %s9 = sld [smem:[#allocation0]]
  $region42: #{gnn_layer.1} parent=0
    _
  %s11 = ssub.s32 1, %s9
  %s12 = scalar_select 0, %s11, %s9
  // Predicated region
  $region2: #{gnn_layer.1} parent=0 // pred_check
    _
  $region3: #{gnn_layer.1} parent=0 // pred_check_branch
    %14 = sbr.rel (0) target = $region5
  $region4: #{gnn_layer.1} parent=0 // pred_region
    _
  $region5: #{gnn_layer.1} parent=0 // pred_fallthru
    _
  // Predicated region
  $region6: #{gnn_layer.1} parent=0 // pred_check
    _
  $region7: #{gnn_layer.1} parent=0 // pred_check_branch
    %16 = sbr.rel (0) target = $region9
  $region8: #{gnn_layer.1} parent=0 // pred_region
    _
  $region9: #{gnn_layer.1} parent=0 // pred_fallthru
    _
  // Predicated region
  $region10: #{gnn_layer.1} parent=0 // pred_check
    _
  $region11: #{gnn_layer.1} parent=0 // pred_check_branch
    %18 = sbr.rel (0) target = $region13
  $region12: #{gnn_layer.1} parent=0 // pred_region
    _
  $region13: #{gnn_layer.1} parent=0 // pred_fallthru
    _
  // Predicated region
  $region14: #{gnn_layer.1} parent=0 // pred_check
    _
  $region15: #{gnn_layer.1} parent=0 // pred_check_branch
    %20 = sbr.rel (0) target = $region17
  $region16: #{gnn_layer.1} parent=0 // pred_region
    _
  $region17: #{gnn_layer.1} parent=0 // pred_fallthru
    _
  // Predicated region
  $region18: #{gnn_layer.1} parent=0 // pred_check
    _
  $region19: #{gnn_layer.1} parent=0 // pred_check_branch
    %22 = sbr.rel (0) target = $region21
  $region20: #{gnn_layer.1} parent=0 // pred_region
    _
  $region21: #{gnn_layer.1} parent=0 // pred_fallthru
    _
  // Predicated region
  $region22: #{gnn_layer.1} parent=0 // pred_check
    _
  $region23: #{gnn_layer.1} parent=0 // pred_check_branch
    %24 = sbr.rel (0) target = $region25
  $region24: #{gnn_layer.1} parent=0 // pred_region
    _
  $region25: #{gnn_layer.1} parent=0 // pred_fallthru
    _
  %v26 = vld [vmem:[%s0] sm:$0xff]
  %v27 = vlaneseq
  %v28 = vshrl.u32 %v27, 7
  %v29 = vld [vmem:[%s2] sm:$0x1]
  %v30 = vperm.slane %v29, 0
  %vm31 = vcmp.eq.s32.totalorder %v28, %v30
  %v32 = vsel %vm31, 1, 0
  %v33 = vcvt.s32.f32 %v32
  %v34 = vpack.c.bf16 %v33, %v33
  %v35 = vld [vmem:[%s1] sm:$0x1]
  %v36 = vperm.slane %v35, 0
  %vm37 = vcmp.eq.s32.totalorder %v28, %v36
  %v38 = vsel %vm37, 1, 0
  %v39 = vcvt.s32.f32 %v38
  %v40 = vpack.c.bf16 %v39, %v39
  %41 = vmatpush.bf16.xpose.msra.mxu0 0
  %42 = vmatpush.bf16.xpose.msra.mxu0 0
  %43 = vmatpush.bf16.xpose.msra.mxu0 0
  %44 = vmatpush.bf16.xpose.msra.mxu0 0
  %45 = vmatpush.bf16.xpose.msra.mxu0 0
  %46 = vmatpush.bf16.xpose.msra.mxu0 0
  %47 = vmatpush.bf16.xpose.msra.mxu0 0
  %48 = vmatpush.bf16.xpose.msra.mxu0 %v40
  %49 = vmatmul.bf16.gmra.mxu0 %v34
  %v50 = vpop.f32.mrf.mxu0
  %v51 = vadd.f32 0.0, %v50
  %v52 = vpop.f32.mrf.mxu0
  %53 = vdwg.mxu0
  %vm54 = vcmp.gt.f32.partialorder %v51, 0.5
  %v55 = vsel %vm54, 1, 0
  %v56 = vcvt.s32.f32 %v55
  %v57 = vsel %vm54, 0.0, -1e+30
  %v58 = vld [vmem:[%s3] sm:$0xff]
  %v59 = vld [vmem:[%s3 + $0x8] sm:$0xff]
  %v60 = vld [vmem:[%s3 + $0x10] sm:$0xff]
  %v61 = vld [vmem:[%s3 + $0x18] sm:$0xff]
  %v62 = vld [vmem:[%s3 + $0x20] sm:$0xff]
  %v63 = vld [vmem:[%s3 + $0x28] sm:$0xff]
  %v64 = vld [vmem:[%s3 + $0x30] sm:$0xff]
  %v65 = vld [vmem:[%s3 + $0x38] sm:$0xff]
  %v66 = vld [vmem:[%s3 + $0x40] sm:$0xff]
  %v67 = vld [vmem:[%s3 + $0x48] sm:$0xff]
  %v68 = vld [vmem:[%s3 + $0x50] sm:$0xff]
  %v69 = vld [vmem:[%s3 + $0x58] sm:$0xff]
  %v70 = vld [vmem:[%s3 + $0x60] sm:$0xff]
  %v71 = vld [vmem:[%s3 + $0x68] sm:$0xff]
  %v72 = vld [vmem:[%s3 + $0x70] sm:$0xff]
  %v73 = vld [vmem:[%s3 + $0x78] sm:$0xff]
  %v74 = vld [vmem:[%s3 + $0x80] sm:$0xff]
  %v75 = vld [vmem:[%s3 + $0x88] sm:$0xff]
  %v76 = vld [vmem:[%s3 + $0x90] sm:$0xff]
  %v77 = vld [vmem:[%s3 + $0x98] sm:$0xff]
  %v78 = vld [vmem:[%s3 + $0xa0] sm:$0xff]
  %v79 = vld [vmem:[%s3 + $0xa8] sm:$0xff]
  %v80 = vld [vmem:[%s3 + $0xb0] sm:$0xff]
  %v81 = vld [vmem:[%s3 + $0xb8] sm:$0xff]
  %v82 = vld [vmem:[%s3 + $0xc0] sm:$0xff]
  %v83 = vld [vmem:[%s3 + $0xc8] sm:$0xff]
  %v84 = vld [vmem:[%s3 + $0xd0] sm:$0xff]
  %v85 = vld [vmem:[%s3 + $0xd8] sm:$0xff]
  %v86 = vld [vmem:[%s3 + $0xe0] sm:$0xff]
  %v87 = vld [vmem:[%s3 + $0xe8] sm:$0xff]
  %v88 = vld [vmem:[%s3 + $0xf0] sm:$0xff]
  %v89 = vld [vmem:[%s3 + $0xf8] sm:$0xff]
  %v90 = vld [vmem:[%s4] sm:$0xf]
  %v91 = vpack.c.bf16 %v26, %v26
  %v93 = vperm.slane %v90, 0
  %v94 = vperm.slane %v90, 1
  %v95 = vperm.slane %v90, 2
  %v96 = vperm.slane %v90, 3
  %v133 = vunpack.c.l.b16 %v58
  %v134 = vunpack.c.h.b16 %v58
  %v135 = vunpack.c.l.b16 %v59
  %v136 = vunpack.c.h.b16 %v59
  %v137 = vunpack.c.l.b16 %v60
  %v138 = vunpack.c.h.b16 %v60
  %v139 = vunpack.c.l.b16 %v61
  %v140 = vunpack.c.h.b16 %v61
  %v141 = vunpack.c.l.b16 %v62
  %v142 = vunpack.c.h.b16 %v62
  %v143 = vunpack.c.l.b16 %v63
  %v144 = vunpack.c.h.b16 %v63
  %v145 = vunpack.c.l.b16 %v64
  %v146 = vunpack.c.h.b16 %v64
  %v147 = vunpack.c.l.b16 %v65
  %v148 = vunpack.c.h.b16 %v65
  %v149 = vunpack.c.l.b16 %v66
  %v150 = vunpack.c.h.b16 %v66
  %v151 = vunpack.c.l.b16 %v67
  %v152 = vunpack.c.h.b16 %v67
  %v153 = vunpack.c.l.b16 %v68
  %v154 = vunpack.c.h.b16 %v68
  %v155 = vunpack.c.l.b16 %v69
  %v156 = vunpack.c.h.b16 %v69
  %v157 = vunpack.c.l.b16 %v70
  %v158 = vunpack.c.h.b16 %v70
  %v159 = vunpack.c.l.b16 %v71
  %v160 = vunpack.c.h.b16 %v71
  %v161 = vunpack.c.l.b16 %v72
  %v162 = vunpack.c.h.b16 %v72
  %v163 = vunpack.c.l.b16 %v73
  %v164 = vunpack.c.h.b16 %v73
  %v165 = vunpack.c.l.b16 %v74
  %v166 = vunpack.c.h.b16 %v74
  %v167 = vunpack.c.l.b16 %v75
  %v168 = vunpack.c.h.b16 %v75
  %v169 = vunpack.c.l.b16 %v76
  %v170 = vunpack.c.h.b16 %v76
  %v171 = vunpack.c.l.b16 %v77
  %v172 = vunpack.c.h.b16 %v77
  %v173 = vunpack.c.l.b16 %v78
  %v174 = vunpack.c.h.b16 %v78
  %v175 = vunpack.c.l.b16 %v79
  %v176 = vunpack.c.h.b16 %v79
  %v177 = vunpack.c.l.b16 %v80
  %v178 = vunpack.c.h.b16 %v80
  %v179 = vunpack.c.l.b16 %v81
  %v180 = vunpack.c.h.b16 %v81
  %v181 = vunpack.c.l.b16 %v82
  %v182 = vunpack.c.h.b16 %v82
  %v183 = vunpack.c.l.b16 %v83
  %v184 = vunpack.c.h.b16 %v83
  %v185 = vunpack.c.l.b16 %v84
  %v186 = vunpack.c.h.b16 %v84
  %v187 = vunpack.c.l.b16 %v85
  %v188 = vunpack.c.h.b16 %v85
  %v189 = vunpack.c.l.b16 %v86
  %v190 = vunpack.c.h.b16 %v86
  %v191 = vunpack.c.l.b16 %v87
  %v192 = vunpack.c.h.b16 %v87
  %v193 = vunpack.c.l.b16 %v88
  %v194 = vunpack.c.h.b16 %v88
  %v195 = vunpack.c.l.b16 %v89
  %v196 = vunpack.c.h.b16 %v89
  %v197 = vpack.c.b16 %v137, %v133
  %v198 = vpack.c.b16 %v138, %v134
  %v199 = vpack.c.b16 %v139, %v135
  %v200 = vpack.c.b16 %v140, %v136
  %v201 = vpack.c.b16 %v145, %v141
  %v202 = vpack.c.b16 %v146, %v142
  %v203 = vpack.c.b16 %v147, %v143
  %v204 = vpack.c.b16 %v148, %v144
  %v205 = vpack.c.b16 %v153, %v149
  %v206 = vpack.c.b16 %v154, %v150
  %v207 = vpack.c.b16 %v155, %v151
  %v208 = vpack.c.b16 %v156, %v152
  %v209 = vpack.c.b16 %v161, %v157
  %v210 = vpack.c.b16 %v162, %v158
  %v211 = vpack.c.b16 %v163, %v159
  %v212 = vpack.c.b16 %v164, %v160
  %v213 = vpack.c.b16 %v169, %v165
  %v214 = vpack.c.b16 %v170, %v166
  %v215 = vpack.c.b16 %v171, %v167
  %v216 = vpack.c.b16 %v172, %v168
  %v217 = vpack.c.b16 %v177, %v173
  %v218 = vpack.c.b16 %v178, %v174
  %v219 = vpack.c.b16 %v179, %v175
  %v220 = vpack.c.b16 %v180, %v176
  %v221 = vpack.c.b16 %v185, %v181
  %v222 = vpack.c.b16 %v186, %v182
  %v223 = vpack.c.b16 %v187, %v183
  %v224 = vpack.c.b16 %v188, %v184
  %v225 = vpack.c.b16 %v193, %v189
  %v226 = vpack.c.b16 %v194, %v190
  %v227 = vpack.c.b16 %v195, %v191
  %v228 = vpack.c.b16 %v196, %v192
  %261 = vmatpush.bf16.msra.mxu0 %v225
  %262 = vmatpush.bf16.msra.mxu0 %v221
  %263 = vmatpush.bf16.msra.mxu0 %v217
  %264 = vmatpush.bf16.msra.mxu0 %v213
  %265 = vmatpush.bf16.msra.mxu0 %v209
  %266 = vmatpush.bf16.msra.mxu0 %v205
  %267 = vmatpush.bf16.msra.mxu0 %v201
  %268 = vmatpush.bf16.msra.mxu0 %v197
  %269 = vmatmul.bf16.gmra.mxu0 %v91
  %v270 = vpop.f32.mrf.mxu0
  %v271 = vadd.f32 %v93, %v270
  %v272 = vpop.f32.mrf.mxu0
  %273 = vdwg.mxu0
  %274 = vmatpush.bf16.msra.mxu0 %v226
  %275 = vmatpush.bf16.msra.mxu0 %v222
  %276 = vmatpush.bf16.msra.mxu0 %v218
  %277 = vmatpush.bf16.msra.mxu0 %v214
  %278 = vmatpush.bf16.msra.mxu0 %v210
  %279 = vmatpush.bf16.msra.mxu0 %v206
  %280 = vmatpush.bf16.msra.mxu0 %v202
  %281 = vmatpush.bf16.msra.mxu0 %v198
  %282 = vmatmul.bf16.gmra.mxu0 %v91
  %v283 = vpop.f32.mrf.mxu0
  %v284 = vadd.f32 %v94, %v283
  %v285 = vpop.f32.mrf.mxu0
  %286 = vdwg.mxu0
  %287 = vmatpush.bf16.msra.mxu0 %v227
  %288 = vmatpush.bf16.msra.mxu0 %v223
  %289 = vmatpush.bf16.msra.mxu0 %v219
  %290 = vmatpush.bf16.msra.mxu0 %v215
  %291 = vmatpush.bf16.msra.mxu0 %v211
  %292 = vmatpush.bf16.msra.mxu0 %v207
  %293 = vmatpush.bf16.msra.mxu0 %v203
  %294 = vmatpush.bf16.msra.mxu0 %v199
  %295 = vmatmul.bf16.gmra.mxu0 %v91
  %v296 = vpop.f32.mrf.mxu0
  %v297 = vadd.f32 %v95, %v296
  %v298 = vpop.f32.mrf.mxu0
  %299 = vdwg.mxu0
  %300 = vmatpush.bf16.msra.mxu0 %v228
  %301 = vmatpush.bf16.msra.mxu0 %v224
  %302 = vmatpush.bf16.msra.mxu0 %v220
  %303 = vmatpush.bf16.msra.mxu0 %v216
  %304 = vmatpush.bf16.msra.mxu0 %v212
  %305 = vmatpush.bf16.msra.mxu0 %v208
  %306 = vmatpush.bf16.msra.mxu0 %v204
  %307 = vmatpush.bf16.msra.mxu0 %v200
  %308 = vmatmul.bf16.gmra.mxu0 %v91
  %v309 = vpop.f32.mrf.mxu0
  %v310 = vadd.f32 %v96, %v309
  %v311 = vpop.f32.mrf.mxu0
  %312 = vdwg.mxu0
  %v313 = vpack.c.bf16 %v271, %v271
  %v314 = vpack.c.bf16 %v284, %v284
  %315 = vmatpush.bf16.xpose.msra.mxu0 0
  %316 = vmatpush.bf16.xpose.msra.mxu0 0
  %317 = vmatpush.bf16.xpose.msra.mxu0 0
  %318 = vmatpush.bf16.xpose.msra.mxu0 0
  %319 = vmatpush.bf16.xpose.msra.mxu0 0
  %320 = vmatpush.bf16.xpose.msra.mxu0 0
  %321 = vmatpush.bf16.xpose.msra.mxu0 0
  %322 = vmatpush.bf16.xpose.msra.mxu0 %v314
  %323 = vmatmul.bf16.gmra.mxu0 %v313
  %v324 = vpop.f32.mrf.mxu0
  %v325 = vadd.f32 %v57, %v324
  %v326 = vpop.f32.mrf.mxu0
  %327 = vdwg.mxu0
  %vm328 = vcmask 64512
  %v329 = vsel %vm328, %v325, -inf
  %330 = vmax.xlane.f32.xlu0 %v329
  %v331 = vpop.xlane.xlu0 %330
  %v332 = vsub.f32 %v325, %v331
  %v333 = vmul.f32 %v332, 1.442695
  %v334 = vpow.pop %v333
  %v335 = vmul.f32 %v334, %v56
  %v336 = vsel %vm328, %v335, 0.0
  %337 = vadd.xlane.f32.xlu0 %v336
  %v338 = vpop.xlane.xlu0 %337
  %v339 = vmax.f32 %v338, 1e-16
  %v340 = vrcp.pop %v339
  %v341 = vmul.f32 %v335, %v340
  %v342 = vpack.c.bf16 %v341, %v341
  %v343 = vpack.c.bf16 %v297, %v297
  %v345 = vsel %vm328, %v342, 0
  %vm347 = vcmask 1043456
  %v349 = vsel %vm347, %v343, 0
  %351 = vmatpush.bf16.msra.mxu0 0
  %352 = vmatpush.bf16.msra.mxu0 0
  %353 = vmatpush.bf16.msra.mxu0 0
  %354 = vmatpush.bf16.msra.mxu0 0
  %355 = vmatpush.bf16.msra.mxu0 0
  %356 = vmatpush.bf16.msra.mxu0 0
  %357 = vmatpush.bf16.msra.mxu0 0
  %358 = vmatpush.bf16.msra.mxu0 %v349
  %359 = vmatmul.bf16.gmra.mxu0 %v345
  %v360 = vpop.f32.mrf.mxu0
  %v361 = vadd.f32 %v310, %v360
  %v362 = vpop.f32.mrf.mxu0
  %363 = vdwg.mxu0
  %v364 = vld [vmem:[%s5] sm:$0x3]
  %v365 = vrot.slane %v361, 4
  %v366 = vadd.f32 %v361, %v365
  %v367 = vrot.slane %v366, 2
  %v368 = vadd.f32 %v366, %v367
  %v369 = vrot.slane %v368, 1
  %v370 = vadd.f32 %v368, %v369
  %v371 = vmul.f32 %v361, %v361
  %v372 = vrot.slane %v371, 4
  %v373 = vadd.f32 %v371, %v372
  %v374 = vrot.slane %v373, 2
  %v375 = vadd.f32 %v373, %v374
  %v376 = vrot.slane %v375, 1
  %v377 = vadd.f32 %v375, %v376
  %v378 = vmul.f32 %v370, 0.125
  %v379 = vmul.f32 %v377, 0.125
  %v380 = vmul.f32 %v378, %v378
  %v381 = vsub.f32 %v379, %v380
  %v382 = vmax.f32 %v381, 0.0
  %v383 = vadd.f32 %v382, 1e-05
  %v384 = vrsqrt.pop %v383
  %v385 = vmul.f32 %v384, %v383
  %v386 = vmul.f32 %v385, %v384
  %v387 = vmul.f32 0.5, %v386
  %v388 = vsub.f32 1.5, %v387
  %v389 = vmul.f32 %v384, %v388
  %vm390 = vweird.f32 %v383
  %vm391 = vweird.f32 %v384
  %vm392 = vmor %vm390, %vm391
  %v393 = vsel %vm392, %v384, %v389
  %v394 = vmul.f32 %v364, %v393
  %v395 = vmul.f32 %v378, %v394
  %v397 = vrot.slane %v395, 7
  %v399 = vsub.f32 %v364, %v397
  %v400 = vperm.slane %v394, 0
  %v401 = vmul.f32 %v361, %v400
  %v402 = vperm.slane %v399, 1
  %v403 = vadd.f32 %v401, %v402
  %v404 = vmax.f32 %v403, 0.0
  %s405 = scalar_lea.vmem %s3, 256
  %v406 = vld [vmem:[%s405] sm:$0xff]
  %v407 = vld [vmem:[%s405 + $0x8] sm:$0xff]
  %v408 = vld [vmem:[%s405 + $0x10] sm:$0xff]
  %v409 = vld [vmem:[%s405 + $0x18] sm:$0xff]
  %v410 = vld [vmem:[%s405 + $0x20] sm:$0xff]
  %v411 = vld [vmem:[%s405 + $0x28] sm:$0xff]
  %v412 = vld [vmem:[%s405 + $0x30] sm:$0xff]
  %v413 = vld [vmem:[%s405 + $0x38] sm:$0xff]
  %v414 = vld [vmem:[%s405 + $0x40] sm:$0xff]
  %v415 = vld [vmem:[%s405 + $0x48] sm:$0xff]
  %v416 = vld [vmem:[%s405 + $0x50] sm:$0xff]
  %v417 = vld [vmem:[%s405 + $0x58] sm:$0xff]
  %v418 = vld [vmem:[%s405 + $0x60] sm:$0xff]
  %v419 = vld [vmem:[%s405 + $0x68] sm:$0xff]
  %v420 = vld [vmem:[%s405 + $0x70] sm:$0xff]
  %v421 = vld [vmem:[%s405 + $0x78] sm:$0xff]
  %v422 = vld [vmem:[%s405 + $0x80] sm:$0xff]
  %v423 = vld [vmem:[%s405 + $0x88] sm:$0xff]
  %v424 = vld [vmem:[%s405 + $0x90] sm:$0xff]
  %v425 = vld [vmem:[%s405 + $0x98] sm:$0xff]
  %v426 = vld [vmem:[%s405 + $0xa0] sm:$0xff]
  %v427 = vld [vmem:[%s405 + $0xa8] sm:$0xff]
  %v428 = vld [vmem:[%s405 + $0xb0] sm:$0xff]
  %v429 = vld [vmem:[%s405 + $0xb8] sm:$0xff]
  %v430 = vld [vmem:[%s405 + $0xc0] sm:$0xff]
  %v431 = vld [vmem:[%s405 + $0xc8] sm:$0xff]
  %v432 = vld [vmem:[%s405 + $0xd0] sm:$0xff]
  %v433 = vld [vmem:[%s405 + $0xd8] sm:$0xff]
  %v434 = vld [vmem:[%s405 + $0xe0] sm:$0xff]
  %v435 = vld [vmem:[%s405 + $0xe8] sm:$0xff]
  %v436 = vld [vmem:[%s405 + $0xf0] sm:$0xff]
  %v437 = vld [vmem:[%s405 + $0xf8] sm:$0xff]
  %s438 = scalar_lea.vmem %s4, 4
  %v439 = vld [vmem:[%s438] sm:$0xf]
  %v440 = vpack.c.bf16 %v404, %v404
  %v442 = vperm.slane %v439, 0
  %v443 = vperm.slane %v439, 1
  %v444 = vperm.slane %v439, 2
  %v445 = vperm.slane %v439, 3
  %v482 = vunpack.c.l.b16 %v406
  %v483 = vunpack.c.h.b16 %v406
  %v484 = vunpack.c.l.b16 %v407
  %v485 = vunpack.c.h.b16 %v407
  %v486 = vunpack.c.l.b16 %v408
  %v487 = vunpack.c.h.b16 %v408
  %v488 = vunpack.c.l.b16 %v409
  %v489 = vunpack.c.h.b16 %v409
  %v490 = vunpack.c.l.b16 %v410
  %v491 = vunpack.c.h.b16 %v410
  %v492 = vunpack.c.l.b16 %v411
  %v493 = vunpack.c.h.b16 %v411
  %v494 = vunpack.c.l.b16 %v412
  %v495 = vunpack.c.h.b16 %v412
  %v496 = vunpack.c.l.b16 %v413
  %v497 = vunpack.c.h.b16 %v413
  %v498 = vunpack.c.l.b16 %v414
  %v499 = vunpack.c.h.b16 %v414
  %v500 = vunpack.c.l.b16 %v415
  %v501 = vunpack.c.h.b16 %v415
  %v502 = vunpack.c.l.b16 %v416
  %v503 = vunpack.c.h.b16 %v416
  %v504 = vunpack.c.l.b16 %v417
  %v505 = vunpack.c.h.b16 %v417
  %v506 = vunpack.c.l.b16 %v418
  %v507 = vunpack.c.h.b16 %v418
  %v508 = vunpack.c.l.b16 %v419
  %v509 = vunpack.c.h.b16 %v419
  %v510 = vunpack.c.l.b16 %v420
  %v511 = vunpack.c.h.b16 %v420
  %v512 = vunpack.c.l.b16 %v421
  %v513 = vunpack.c.h.b16 %v421
  %v514 = vunpack.c.l.b16 %v422
  %v515 = vunpack.c.h.b16 %v422
  %v516 = vunpack.c.l.b16 %v423
  %v517 = vunpack.c.h.b16 %v423
  %v518 = vunpack.c.l.b16 %v424
  %v519 = vunpack.c.h.b16 %v424
  %v520 = vunpack.c.l.b16 %v425
  %v521 = vunpack.c.h.b16 %v425
  %v522 = vunpack.c.l.b16 %v426
  %v523 = vunpack.c.h.b16 %v426
  %v524 = vunpack.c.l.b16 %v427
  %v525 = vunpack.c.h.b16 %v427
  %v526 = vunpack.c.l.b16 %v428
  %v527 = vunpack.c.h.b16 %v428
  %v528 = vunpack.c.l.b16 %v429
  %v529 = vunpack.c.h.b16 %v429
  %v530 = vunpack.c.l.b16 %v430
  %v531 = vunpack.c.h.b16 %v430
  %v532 = vunpack.c.l.b16 %v431
  %v533 = vunpack.c.h.b16 %v431
  %v534 = vunpack.c.l.b16 %v432
  %v535 = vunpack.c.h.b16 %v432
  %v536 = vunpack.c.l.b16 %v433
  %v537 = vunpack.c.h.b16 %v433
  %v538 = vunpack.c.l.b16 %v434
  %v539 = vunpack.c.h.b16 %v434
  %v540 = vunpack.c.l.b16 %v435
  %v541 = vunpack.c.h.b16 %v435
  %v542 = vunpack.c.l.b16 %v436
  %v543 = vunpack.c.h.b16 %v436
  %v544 = vunpack.c.l.b16 %v437
  %v545 = vunpack.c.h.b16 %v437
  %v546 = vpack.c.b16 %v486, %v482
  %v547 = vpack.c.b16 %v487, %v483
  %v548 = vpack.c.b16 %v488, %v484
  %v549 = vpack.c.b16 %v489, %v485
  %v550 = vpack.c.b16 %v494, %v490
  %v551 = vpack.c.b16 %v495, %v491
  %v552 = vpack.c.b16 %v496, %v492
  %v553 = vpack.c.b16 %v497, %v493
  %v554 = vpack.c.b16 %v502, %v498
  %v555 = vpack.c.b16 %v503, %v499
  %v556 = vpack.c.b16 %v504, %v500
  %v557 = vpack.c.b16 %v505, %v501
  %v558 = vpack.c.b16 %v510, %v506
  %v559 = vpack.c.b16 %v511, %v507
  %v560 = vpack.c.b16 %v512, %v508
  %v561 = vpack.c.b16 %v513, %v509
  %v562 = vpack.c.b16 %v518, %v514
  %v563 = vpack.c.b16 %v519, %v515
  %v564 = vpack.c.b16 %v520, %v516
  %v565 = vpack.c.b16 %v521, %v517
  %v566 = vpack.c.b16 %v526, %v522
  %v567 = vpack.c.b16 %v527, %v523
  %v568 = vpack.c.b16 %v528, %v524
  %v569 = vpack.c.b16 %v529, %v525
  %v570 = vpack.c.b16 %v534, %v530
  %v571 = vpack.c.b16 %v535, %v531
  %v572 = vpack.c.b16 %v536, %v532
  %v573 = vpack.c.b16 %v537, %v533
  %v574 = vpack.c.b16 %v542, %v538
  %v575 = vpack.c.b16 %v543, %v539
  %v576 = vpack.c.b16 %v544, %v540
  %v577 = vpack.c.b16 %v545, %v541
  %610 = vmatpush.bf16.msra.mxu0 %v574
  %611 = vmatpush.bf16.msra.mxu0 %v570
  %612 = vmatpush.bf16.msra.mxu0 %v566
  %613 = vmatpush.bf16.msra.mxu0 %v562
  %614 = vmatpush.bf16.msra.mxu0 %v558
  %615 = vmatpush.bf16.msra.mxu0 %v554
  %616 = vmatpush.bf16.msra.mxu0 %v550
  %617 = vmatpush.bf16.msra.mxu0 %v546
  %618 = vmatmul.bf16.gmra.mxu0 %v440
  %v619 = vpop.f32.mrf.mxu0
  %v620 = vadd.f32 %v442, %v619
  %v621 = vpop.f32.mrf.mxu0
  %622 = vdwg.mxu0
  %623 = vmatpush.bf16.msra.mxu0 %v575
  %624 = vmatpush.bf16.msra.mxu0 %v571
  %625 = vmatpush.bf16.msra.mxu0 %v567
  %626 = vmatpush.bf16.msra.mxu0 %v563
  %627 = vmatpush.bf16.msra.mxu0 %v559
  %628 = vmatpush.bf16.msra.mxu0 %v555
  %629 = vmatpush.bf16.msra.mxu0 %v551
  %630 = vmatpush.bf16.msra.mxu0 %v547
  %631 = vmatmul.bf16.gmra.mxu0 %v440
  %v632 = vpop.f32.mrf.mxu0
  %v633 = vadd.f32 %v443, %v632
  %v634 = vpop.f32.mrf.mxu0
  %635 = vdwg.mxu0
  %636 = vmatpush.bf16.msra.mxu0 %v576
  %637 = vmatpush.bf16.msra.mxu0 %v572
  %638 = vmatpush.bf16.msra.mxu0 %v568
  %639 = vmatpush.bf16.msra.mxu0 %v564
  %640 = vmatpush.bf16.msra.mxu0 %v560
  %641 = vmatpush.bf16.msra.mxu0 %v556
  %642 = vmatpush.bf16.msra.mxu0 %v552
  %643 = vmatpush.bf16.msra.mxu0 %v548
  %644 = vmatmul.bf16.gmra.mxu0 %v440
  %v645 = vpop.f32.mrf.mxu0
  %v646 = vadd.f32 %v444, %v645
  %v647 = vpop.f32.mrf.mxu0
  %648 = vdwg.mxu0
  %649 = vmatpush.bf16.msra.mxu0 %v577
  %650 = vmatpush.bf16.msra.mxu0 %v573
  %651 = vmatpush.bf16.msra.mxu0 %v569
  %652 = vmatpush.bf16.msra.mxu0 %v565
  %653 = vmatpush.bf16.msra.mxu0 %v561
  %654 = vmatpush.bf16.msra.mxu0 %v557
  %655 = vmatpush.bf16.msra.mxu0 %v553
  %656 = vmatpush.bf16.msra.mxu0 %v549
  %657 = vmatmul.bf16.gmra.mxu0 %v440
  %v658 = vpop.f32.mrf.mxu0
  %v659 = vadd.f32 %v445, %v658
  %v660 = vpop.f32.mrf.mxu0
  %661 = vdwg.mxu0
  %v662 = vpack.c.bf16 %v620, %v620
  %v663 = vpack.c.bf16 %v633, %v633
  %664 = vmatpush.bf16.xpose.msra.mxu0 0
  %665 = vmatpush.bf16.xpose.msra.mxu0 0
  %666 = vmatpush.bf16.xpose.msra.mxu0 0
  %667 = vmatpush.bf16.xpose.msra.mxu0 0
  %668 = vmatpush.bf16.xpose.msra.mxu0 0
  %669 = vmatpush.bf16.xpose.msra.mxu0 0
  %670 = vmatpush.bf16.xpose.msra.mxu0 0
  %671 = vmatpush.bf16.xpose.msra.mxu0 %v663
  %672 = vmatmul.bf16.gmra.mxu0 %v662
  %v673 = vpop.f32.mrf.mxu0
  %v674 = vadd.f32 %v57, %v673
  %v675 = vpop.f32.mrf.mxu0
  %676 = vdwg.mxu0
  %v677 = vsel %vm328, %v674, -inf
  %678 = vmax.xlane.f32.xlu0 %v677
  %v679 = vpop.xlane.xlu0 %678
  %v680 = vsub.f32 %v674, %v679
  %v681 = vmul.f32 %v680, 1.442695
  %v682 = vpow.pop %v681
  %v683 = vmul.f32 %v682, %v56
  %v684 = vsel %vm328, %v683, 0.0
  %685 = vadd.xlane.f32.xlu0 %v684
  %v686 = vpop.xlane.xlu0 %685
  %v687 = vmax.f32 %v686, 1e-16
  %v688 = vrcp.pop %v687
  %v689 = vmul.f32 %v683, %v688
  %v690 = vpack.c.bf16 %v689, %v689
  %v691 = vpack.c.bf16 %v646, %v646
  %v693 = vsel %vm328, %v690, 0
  %v696 = vsel %vm347, %v691, 0
  %698 = vmatpush.bf16.msra.mxu0 0
  %699 = vmatpush.bf16.msra.mxu0 0
  %700 = vmatpush.bf16.msra.mxu0 0
  %701 = vmatpush.bf16.msra.mxu0 0
  %702 = vmatpush.bf16.msra.mxu0 0
  %703 = vmatpush.bf16.msra.mxu0 0
  %704 = vmatpush.bf16.msra.mxu0 0
  %705 = vmatpush.bf16.msra.mxu0 %v696
  %706 = vmatmul.bf16.gmra.mxu0 %v693
  %v707 = vpop.f32.mrf.mxu0
  %v708 = vadd.f32 %v659, %v707
  %v709 = vpop.f32.mrf.mxu0
  %710 = vdwg.mxu0
  %s711 = scalar_lea.vmem %s5, 2
  %v712 = vld [vmem:[%s711] sm:$0x3]
  %v713 = vrot.slane %v708, 4
  %v714 = vadd.f32 %v708, %v713
  %v715 = vrot.slane %v714, 2
  %v716 = vadd.f32 %v714, %v715
  %v717 = vrot.slane %v716, 1
  %v718 = vadd.f32 %v716, %v717
  %v719 = vmul.f32 %v708, %v708
  %v720 = vrot.slane %v719, 4
  %v721 = vadd.f32 %v719, %v720
  %v722 = vrot.slane %v721, 2
  %v723 = vadd.f32 %v721, %v722
  %v724 = vrot.slane %v723, 1
  %v725 = vadd.f32 %v723, %v724
  %v726 = vmul.f32 %v718, 0.125
  %v727 = vmul.f32 %v725, 0.125
  %v728 = vmul.f32 %v726, %v726
  %v729 = vsub.f32 %v727, %v728
  %v730 = vmax.f32 %v729, 0.0
  %v731 = vadd.f32 %v730, 1e-05
  %v732 = vrsqrt.pop %v731
  %v733 = vmul.f32 %v732, %v731
  %v734 = vmul.f32 %v733, %v732
  %v735 = vmul.f32 0.5, %v734
  %v736 = vsub.f32 1.5, %v735
  %v737 = vmul.f32 %v732, %v736
  %vm738 = vweird.f32 %v731
  %vm739 = vweird.f32 %v732
  %vm740 = vmor %vm738, %vm739
  %v741 = vsel %vm740, %v732, %v737
  %v742 = vmul.f32 %v712, %v741
  %v743 = vmul.f32 %v726, %v742
  %v745 = vrot.slane %v743, 7
  %v747 = vsub.f32 %v712, %v745
  %v748 = vperm.slane %v742, 0
  %v749 = vmul.f32 %v708, %v748
  %v750 = vperm.slane %v747, 1
  %v751 = vadd.f32 %v749, %v750
  %v752 = vadd.f32 %v751, %v26
  %v753 = vmax.f32 %v752, 0.0
  %v754 = vadd.f32 %v341, 0.0
  %v755 = vadd.f32 %v754, %v689
  %s756 = scalar_lea.vmem %s3, 512
  %v757 = vld [vmem:[%s756] sm:$0xff]
  %v758 = vld [vmem:[%s756 + $0x8] sm:$0xff]
  %v759 = vld [vmem:[%s756 + $0x10] sm:$0xff]
  %v760 = vld [vmem:[%s756 + $0x18] sm:$0xff]
  %v761 = vld [vmem:[%s756 + $0x20] sm:$0xff]
  %v762 = vld [vmem:[%s756 + $0x28] sm:$0xff]
  %v763 = vld [vmem:[%s756 + $0x30] sm:$0xff]
  %v764 = vld [vmem:[%s756 + $0x38] sm:$0xff]
  %v765 = vld [vmem:[%s756 + $0x40] sm:$0xff]
  %v766 = vld [vmem:[%s756 + $0x48] sm:$0xff]
  %v767 = vld [vmem:[%s756 + $0x50] sm:$0xff]
  %v768 = vld [vmem:[%s756 + $0x58] sm:$0xff]
  %v769 = vld [vmem:[%s756 + $0x60] sm:$0xff]
  %v770 = vld [vmem:[%s756 + $0x68] sm:$0xff]
  %v771 = vld [vmem:[%s756 + $0x70] sm:$0xff]
  %v772 = vld [vmem:[%s756 + $0x78] sm:$0xff]
  %v773 = vld [vmem:[%s756 + $0x80] sm:$0xff]
  %v774 = vld [vmem:[%s756 + $0x88] sm:$0xff]
  %v775 = vld [vmem:[%s756 + $0x90] sm:$0xff]
  %v776 = vld [vmem:[%s756 + $0x98] sm:$0xff]
  %v777 = vld [vmem:[%s756 + $0xa0] sm:$0xff]
  %v778 = vld [vmem:[%s756 + $0xa8] sm:$0xff]
  %v779 = vld [vmem:[%s756 + $0xb0] sm:$0xff]
  %v780 = vld [vmem:[%s756 + $0xb8] sm:$0xff]
  %v781 = vld [vmem:[%s756 + $0xc0] sm:$0xff]
  %v782 = vld [vmem:[%s756 + $0xc8] sm:$0xff]
  %v783 = vld [vmem:[%s756 + $0xd0] sm:$0xff]
  %v784 = vld [vmem:[%s756 + $0xd8] sm:$0xff]
  %v785 = vld [vmem:[%s756 + $0xe0] sm:$0xff]
  %v786 = vld [vmem:[%s756 + $0xe8] sm:$0xff]
  %v787 = vld [vmem:[%s756 + $0xf0] sm:$0xff]
  %v788 = vld [vmem:[%s756 + $0xf8] sm:$0xff]
  %s789 = scalar_lea.vmem %s4, 8
  %v790 = vld [vmem:[%s789] sm:$0xf]
  %v791 = vpack.c.bf16 %v753, %v753
  %v793 = vperm.slane %v790, 0
  %v794 = vperm.slane %v790, 1
  %v795 = vperm.slane %v790, 2
  %v796 = vperm.slane %v790, 3
  %v833 = vunpack.c.l.b16 %v757
  %v834 = vunpack.c.h.b16 %v757
  %v835 = vunpack.c.l.b16 %v758
  %v836 = vunpack.c.h.b16 %v758
  %v837 = vunpack.c.l.b16 %v759
  %v838 = vunpack.c.h.b16 %v759
  %v839 = vunpack.c.l.b16 %v760
  %v840 = vunpack.c.h.b16 %v760
  %v841 = vunpack.c.l.b16 %v761
  %v842 = vunpack.c.h.b16 %v761
  %v843 = vunpack.c.l.b16 %v762
  %v844 = vunpack.c.h.b16 %v762
  %v845 = vunpack.c.l.b16 %v763
  %v846 = vunpack.c.h.b16 %v763
  %v847 = vunpack.c.l.b16 %v764
  %v848 = vunpack.c.h.b16 %v764
  %v849 = vunpack.c.l.b16 %v765
  %v850 = vunpack.c.h.b16 %v765
  %v851 = vunpack.c.l.b16 %v766
  %v852 = vunpack.c.h.b16 %v766
  %v853 = vunpack.c.l.b16 %v767
  %v854 = vunpack.c.h.b16 %v767
  %v855 = vunpack.c.l.b16 %v768
  %v856 = vunpack.c.h.b16 %v768
  %v857 = vunpack.c.l.b16 %v769
  %v858 = vunpack.c.h.b16 %v769
  %v859 = vunpack.c.l.b16 %v770
  %v860 = vunpack.c.h.b16 %v770
  %v861 = vunpack.c.l.b16 %v771
  %v862 = vunpack.c.h.b16 %v771
  %v863 = vunpack.c.l.b16 %v772
  %v864 = vunpack.c.h.b16 %v772
  %v865 = vunpack.c.l.b16 %v773
  %v866 = vunpack.c.h.b16 %v773
  %v867 = vunpack.c.l.b16 %v774
  %v868 = vunpack.c.h.b16 %v774
  %v869 = vunpack.c.l.b16 %v775
  %v870 = vunpack.c.h.b16 %v775
  %v871 = vunpack.c.l.b16 %v776
  %v872 = vunpack.c.h.b16 %v776
  %v873 = vunpack.c.l.b16 %v777
  %v874 = vunpack.c.h.b16 %v777
  %v875 = vunpack.c.l.b16 %v778
  %v876 = vunpack.c.h.b16 %v778
  %v877 = vunpack.c.l.b16 %v779
  %v878 = vunpack.c.h.b16 %v779
  %v879 = vunpack.c.l.b16 %v780
  %v880 = vunpack.c.h.b16 %v780
  %v881 = vunpack.c.l.b16 %v781
  %v882 = vunpack.c.h.b16 %v781
  %v883 = vunpack.c.l.b16 %v782
  %v884 = vunpack.c.h.b16 %v782
  %v885 = vunpack.c.l.b16 %v783
  %v886 = vunpack.c.h.b16 %v783
  %v887 = vunpack.c.l.b16 %v784
  %v888 = vunpack.c.h.b16 %v784
  %v889 = vunpack.c.l.b16 %v785
  %v890 = vunpack.c.h.b16 %v785
  %v891 = vunpack.c.l.b16 %v786
  %v892 = vunpack.c.h.b16 %v786
  %v893 = vunpack.c.l.b16 %v787
  %v894 = vunpack.c.h.b16 %v787
  %v895 = vunpack.c.l.b16 %v788
  %v896 = vunpack.c.h.b16 %v788
  %v897 = vpack.c.b16 %v837, %v833
  %v898 = vpack.c.b16 %v838, %v834
  %v899 = vpack.c.b16 %v839, %v835
  %v900 = vpack.c.b16 %v840, %v836
  %v901 = vpack.c.b16 %v845, %v841
  %v902 = vpack.c.b16 %v846, %v842
  %v903 = vpack.c.b16 %v847, %v843
  %v904 = vpack.c.b16 %v848, %v844
  %v905 = vpack.c.b16 %v853, %v849
  %v906 = vpack.c.b16 %v854, %v850
  %v907 = vpack.c.b16 %v855, %v851
  %v908 = vpack.c.b16 %v856, %v852
  %v909 = vpack.c.b16 %v861, %v857
  %v910 = vpack.c.b16 %v862, %v858
  %v911 = vpack.c.b16 %v863, %v859
  %v912 = vpack.c.b16 %v864, %v860
  %v913 = vpack.c.b16 %v869, %v865
  %v914 = vpack.c.b16 %v870, %v866
  %v915 = vpack.c.b16 %v871, %v867
  %v916 = vpack.c.b16 %v872, %v868
  %v917 = vpack.c.b16 %v877, %v873
  %v918 = vpack.c.b16 %v878, %v874
  %v919 = vpack.c.b16 %v879, %v875
  %v920 = vpack.c.b16 %v880, %v876
  %v921 = vpack.c.b16 %v885, %v881
  %v922 = vpack.c.b16 %v886, %v882
  %v923 = vpack.c.b16 %v887, %v883
  %v924 = vpack.c.b16 %v888, %v884
  %v925 = vpack.c.b16 %v893, %v889
  %v926 = vpack.c.b16 %v894, %v890
  %v927 = vpack.c.b16 %v895, %v891
  %v928 = vpack.c.b16 %v896, %v892
  %961 = vmatpush.bf16.msra.mxu0 %v925
  %962 = vmatpush.bf16.msra.mxu0 %v921
  %963 = vmatpush.bf16.msra.mxu0 %v917
  %964 = vmatpush.bf16.msra.mxu0 %v913
  %965 = vmatpush.bf16.msra.mxu0 %v909
  %966 = vmatpush.bf16.msra.mxu0 %v905
  %967 = vmatpush.bf16.msra.mxu0 %v901
  %968 = vmatpush.bf16.msra.mxu0 %v897
  %969 = vmatmul.bf16.gmra.mxu0 %v791
  %v970 = vpop.f32.mrf.mxu0
  %v971 = vadd.f32 %v793, %v970
  %v972 = vpop.f32.mrf.mxu0
  %973 = vdwg.mxu0
  %974 = vmatpush.bf16.msra.mxu0 %v926
  %975 = vmatpush.bf16.msra.mxu0 %v922
  %976 = vmatpush.bf16.msra.mxu0 %v918
  %977 = vmatpush.bf16.msra.mxu0 %v914
  %978 = vmatpush.bf16.msra.mxu0 %v910
  %979 = vmatpush.bf16.msra.mxu0 %v906
  %980 = vmatpush.bf16.msra.mxu0 %v902
  %981 = vmatpush.bf16.msra.mxu0 %v898
  %982 = vmatmul.bf16.gmra.mxu0 %v791
  %v983 = vpop.f32.mrf.mxu0
  %v984 = vadd.f32 %v794, %v983
  %v985 = vpop.f32.mrf.mxu0
  %986 = vdwg.mxu0
  %987 = vmatpush.bf16.msra.mxu0 %v927
  %988 = vmatpush.bf16.msra.mxu0 %v923
  %989 = vmatpush.bf16.msra.mxu0 %v919
  %990 = vmatpush.bf16.msra.mxu0 %v915
  %991 = vmatpush.bf16.msra.mxu0 %v911
  %992 = vmatpush.bf16.msra.mxu0 %v907
  %993 = vmatpush.bf16.msra.mxu0 %v903
  %994 = vmatpush.bf16.msra.mxu0 %v899
  %995 = vmatmul.bf16.gmra.mxu0 %v791
  %v996 = vpop.f32.mrf.mxu0
  %v997 = vadd.f32 %v795, %v996
  %v998 = vpop.f32.mrf.mxu0
  %999 = vdwg.mxu0
  %1000 = vmatpush.bf16.msra.mxu0 %v928
  %1001 = vmatpush.bf16.msra.mxu0 %v924
  %1002 = vmatpush.bf16.msra.mxu0 %v920
  %1003 = vmatpush.bf16.msra.mxu0 %v916
  %1004 = vmatpush.bf16.msra.mxu0 %v912
  %1005 = vmatpush.bf16.msra.mxu0 %v908
  %1006 = vmatpush.bf16.msra.mxu0 %v904
  %1007 = vmatpush.bf16.msra.mxu0 %v900
  %1008 = vmatmul.bf16.gmra.mxu0 %v791
  %v1009 = vpop.f32.mrf.mxu0
  %v1010 = vadd.f32 %v796, %v1009
  %v1011 = vpop.f32.mrf.mxu0
  %1012 = vdwg.mxu0
  %v1013 = vpack.c.bf16 %v971, %v971
  %v1014 = vpack.c.bf16 %v984, %v984
  %1015 = vmatpush.bf16.xpose.msra.mxu0 0
  %1016 = vmatpush.bf16.xpose.msra.mxu0 0
  %1017 = vmatpush.bf16.xpose.msra.mxu0 0
  %1018 = vmatpush.bf16.xpose.msra.mxu0 0
  %1019 = vmatpush.bf16.xpose.msra.mxu0 0
  %1020 = vmatpush.bf16.xpose.msra.mxu0 0
  %1021 = vmatpush.bf16.xpose.msra.mxu0 0
  %1022 = vmatpush.bf16.xpose.msra.mxu0 %v1014
  %1023 = vmatmul.bf16.gmra.mxu0 %v1013
  %v1024 = vpop.f32.mrf.mxu0
  %v1025 = vadd.f32 %v57, %v1024
  %v1026 = vpop.f32.mrf.mxu0
  %1027 = vdwg.mxu0
  %v1028 = vsel %vm328, %v1025, -inf
  %1029 = vmax.xlane.f32.xlu0 %v1028
  %v1030 = vpop.xlane.xlu0 %1029
  %v1031 = vsub.f32 %v1025, %v1030
  %v1032 = vmul.f32 %v1031, 1.442695
  %v1033 = vpow.pop %v1032
  %v1034 = vmul.f32 %v1033, %v56
  %v1035 = vsel %vm328, %v1034, 0.0
  %1036 = vadd.xlane.f32.xlu0 %v1035
  %v1037 = vpop.xlane.xlu0 %1036
  %v1038 = vmax.f32 %v1037, 1e-16
  %v1039 = vrcp.pop %v1038
  %v1040 = vmul.f32 %v1034, %v1039
  %v1041 = vpack.c.bf16 %v1040, %v1040
  %v1042 = vpack.c.bf16 %v997, %v997
  %v1044 = vsel %vm328, %v1041, 0
  %v1047 = vsel %vm347, %v1042, 0
  %1049 = vmatpush.bf16.msra.mxu0 0
  %1050 = vmatpush.bf16.msra.mxu0 0
  %1051 = vmatpush.bf16.msra.mxu0 0
  %1052 = vmatpush.bf16.msra.mxu0 0
  %1053 = vmatpush.bf16.msra.mxu0 0
  %1054 = vmatpush.bf16.msra.mxu0 0
  %1055 = vmatpush.bf16.msra.mxu0 0
  %1056 = vmatpush.bf16.msra.mxu0 %v1047
  %1057 = vmatmul.bf16.gmra.mxu0 %v1044
  %v1058 = vpop.f32.mrf.mxu0
  %v1059 = vadd.f32 %v1010, %v1058
  %v1060 = vpop.f32.mrf.mxu0
  %1061 = vdwg.mxu0
  %s1062 = scalar_lea.vmem %s5, 4
  %v1063 = vld [vmem:[%s1062] sm:$0x3]
  %v1064 = vrot.slane %v1059, 4
  %v1065 = vadd.f32 %v1059, %v1064
  %v1066 = vrot.slane %v1065, 2
  %v1067 = vadd.f32 %v1065, %v1066
  %v1068 = vrot.slane %v1067, 1
  %v1069 = vadd.f32 %v1067, %v1068
  %v1070 = vmul.f32 %v1059, %v1059
  %v1071 = vrot.slane %v1070, 4
  %v1072 = vadd.f32 %v1070, %v1071
  %v1073 = vrot.slane %v1072, 2
  %v1074 = vadd.f32 %v1072, %v1073
  %v1075 = vrot.slane %v1074, 1
  %v1076 = vadd.f32 %v1074, %v1075
  %v1077 = vmul.f32 %v1069, 0.125
  %v1078 = vmul.f32 %v1076, 0.125
  %v1079 = vmul.f32 %v1077, %v1077
  %v1080 = vsub.f32 %v1078, %v1079
  %v1081 = vmax.f32 %v1080, 0.0
  %v1082 = vadd.f32 %v1081, 1e-05
  %v1083 = vrsqrt.pop %v1082
  %v1084 = vmul.f32 %v1083, %v1082
  %v1085 = vmul.f32 %v1084, %v1083
  %v1086 = vmul.f32 0.5, %v1085
  %v1087 = vsub.f32 1.5, %v1086
  %v1088 = vmul.f32 %v1083, %v1087
  %vm1089 = vweird.f32 %v1082
  %vm1090 = vweird.f32 %v1083
  %vm1091 = vmor %vm1089, %vm1090
  %v1092 = vsel %vm1091, %v1083, %v1088
  %v1093 = vmul.f32 %v1063, %v1092
  %v1094 = vmul.f32 %v1077, %v1093
  %v1096 = vrot.slane %v1094, 7
  %v1098 = vsub.f32 %v1063, %v1096
  %v1099 = vperm.slane %v1093, 0
  %v1100 = vmul.f32 %v1059, %v1099
  %v1101 = vperm.slane %v1098, 1
  %v1102 = vadd.f32 %v1100, %v1101
  %v1103 = vmax.f32 %v1102, 0.0
  %s1104 = scalar_lea.vmem %s3, 768
  %v1105 = vld [vmem:[%s1104] sm:$0xff]
  %v1106 = vld [vmem:[%s1104 + $0x8] sm:$0xff]
  %v1107 = vld [vmem:[%s1104 + $0x10] sm:$0xff]
  %v1108 = vld [vmem:[%s1104 + $0x18] sm:$0xff]
  %v1109 = vld [vmem:[%s1104 + $0x20] sm:$0xff]
  %v1110 = vld [vmem:[%s1104 + $0x28] sm:$0xff]
  %v1111 = vld [vmem:[%s1104 + $0x30] sm:$0xff]
  %v1112 = vld [vmem:[%s1104 + $0x38] sm:$0xff]
  %v1113 = vld [vmem:[%s1104 + $0x40] sm:$0xff]
  %v1114 = vld [vmem:[%s1104 + $0x48] sm:$0xff]
  %v1115 = vld [vmem:[%s1104 + $0x50] sm:$0xff]
  %v1116 = vld [vmem:[%s1104 + $0x58] sm:$0xff]
  %v1117 = vld [vmem:[%s1104 + $0x60] sm:$0xff]
  %v1118 = vld [vmem:[%s1104 + $0x68] sm:$0xff]
  %v1119 = vld [vmem:[%s1104 + $0x70] sm:$0xff]
  %v1120 = vld [vmem:[%s1104 + $0x78] sm:$0xff]
  %v1121 = vld [vmem:[%s1104 + $0x80] sm:$0xff]
  %v1122 = vld [vmem:[%s1104 + $0x88] sm:$0xff]
  %v1123 = vld [vmem:[%s1104 + $0x90] sm:$0xff]
  %v1124 = vld [vmem:[%s1104 + $0x98] sm:$0xff]
  %v1125 = vld [vmem:[%s1104 + $0xa0] sm:$0xff]
  %v1126 = vld [vmem:[%s1104 + $0xa8] sm:$0xff]
  %v1127 = vld [vmem:[%s1104 + $0xb0] sm:$0xff]
  %v1128 = vld [vmem:[%s1104 + $0xb8] sm:$0xff]
  %v1129 = vld [vmem:[%s1104 + $0xc0] sm:$0xff]
  %v1130 = vld [vmem:[%s1104 + $0xc8] sm:$0xff]
  %v1131 = vld [vmem:[%s1104 + $0xd0] sm:$0xff]
  %v1132 = vld [vmem:[%s1104 + $0xd8] sm:$0xff]
  %v1133 = vld [vmem:[%s1104 + $0xe0] sm:$0xff]
  %v1134 = vld [vmem:[%s1104 + $0xe8] sm:$0xff]
  %v1135 = vld [vmem:[%s1104 + $0xf0] sm:$0xff]
  %v1136 = vld [vmem:[%s1104 + $0xf8] sm:$0xff]
  %s1137 = scalar_lea.vmem %s4, 12
  %v1138 = vld [vmem:[%s1137] sm:$0xf]
  %v1139 = vpack.c.bf16 %v1103, %v1103
  %v1141 = vperm.slane %v1138, 0
  %v1142 = vperm.slane %v1138, 1
  %v1143 = vperm.slane %v1138, 2
  %v1144 = vperm.slane %v1138, 3
  %v1181 = vunpack.c.l.b16 %v1105
  %v1182 = vunpack.c.h.b16 %v1105
  %v1183 = vunpack.c.l.b16 %v1106
  %v1184 = vunpack.c.h.b16 %v1106
  %v1185 = vunpack.c.l.b16 %v1107
  %v1186 = vunpack.c.h.b16 %v1107
  %v1187 = vunpack.c.l.b16 %v1108
  %v1188 = vunpack.c.h.b16 %v1108
  %v1189 = vunpack.c.l.b16 %v1109
  %v1190 = vunpack.c.h.b16 %v1109
  %v1191 = vunpack.c.l.b16 %v1110
  %v1192 = vunpack.c.h.b16 %v1110
  %v1193 = vunpack.c.l.b16 %v1111
  %v1194 = vunpack.c.h.b16 %v1111
  %v1195 = vunpack.c.l.b16 %v1112
  %v1196 = vunpack.c.h.b16 %v1112
  %v1197 = vunpack.c.l.b16 %v1113
  %v1198 = vunpack.c.h.b16 %v1113
  %v1199 = vunpack.c.l.b16 %v1114
  %v1200 = vunpack.c.h.b16 %v1114
  %v1201 = vunpack.c.l.b16 %v1115
  %v1202 = vunpack.c.h.b16 %v1115
  %v1203 = vunpack.c.l.b16 %v1116
  %v1204 = vunpack.c.h.b16 %v1116
  %v1205 = vunpack.c.l.b16 %v1117
  %v1206 = vunpack.c.h.b16 %v1117
  %v1207 = vunpack.c.l.b16 %v1118
  %v1208 = vunpack.c.h.b16 %v1118
  %v1209 = vunpack.c.l.b16 %v1119
  %v1210 = vunpack.c.h.b16 %v1119
  %v1211 = vunpack.c.l.b16 %v1120
  %v1212 = vunpack.c.h.b16 %v1120
  %v1213 = vunpack.c.l.b16 %v1121
  %v1214 = vunpack.c.h.b16 %v1121
  %v1215 = vunpack.c.l.b16 %v1122
  %v1216 = vunpack.c.h.b16 %v1122
  %v1217 = vunpack.c.l.b16 %v1123
  %v1218 = vunpack.c.h.b16 %v1123
  %v1219 = vunpack.c.l.b16 %v1124
  %v1220 = vunpack.c.h.b16 %v1124
  %v1221 = vunpack.c.l.b16 %v1125
  %v1222 = vunpack.c.h.b16 %v1125
  %v1223 = vunpack.c.l.b16 %v1126
  %v1224 = vunpack.c.h.b16 %v1126
  %v1225 = vunpack.c.l.b16 %v1127
  %v1226 = vunpack.c.h.b16 %v1127
  %v1227 = vunpack.c.l.b16 %v1128
  %v1228 = vunpack.c.h.b16 %v1128
  %v1229 = vunpack.c.l.b16 %v1129
  %v1230 = vunpack.c.h.b16 %v1129
  %v1231 = vunpack.c.l.b16 %v1130
  %v1232 = vunpack.c.h.b16 %v1130
  %v1233 = vunpack.c.l.b16 %v1131
  %v1234 = vunpack.c.h.b16 %v1131
  %v1235 = vunpack.c.l.b16 %v1132
  %v1236 = vunpack.c.h.b16 %v1132
  %v1237 = vunpack.c.l.b16 %v1133
  %v1238 = vunpack.c.h.b16 %v1133
  %v1239 = vunpack.c.l.b16 %v1134
  %v1240 = vunpack.c.h.b16 %v1134
  %v1241 = vunpack.c.l.b16 %v1135
  %v1242 = vunpack.c.h.b16 %v1135
  %v1243 = vunpack.c.l.b16 %v1136
  %v1244 = vunpack.c.h.b16 %v1136
  %v1245 = vpack.c.b16 %v1185, %v1181
  %v1246 = vpack.c.b16 %v1186, %v1182
  %v1247 = vpack.c.b16 %v1187, %v1183
  %v1248 = vpack.c.b16 %v1188, %v1184
  %v1249 = vpack.c.b16 %v1193, %v1189
  %v1250 = vpack.c.b16 %v1194, %v1190
  %v1251 = vpack.c.b16 %v1195, %v1191
  %v1252 = vpack.c.b16 %v1196, %v1192
  %v1253 = vpack.c.b16 %v1201, %v1197
  %v1254 = vpack.c.b16 %v1202, %v1198
  %v1255 = vpack.c.b16 %v1203, %v1199
  %v1256 = vpack.c.b16 %v1204, %v1200
  %v1257 = vpack.c.b16 %v1209, %v1205
  %v1258 = vpack.c.b16 %v1210, %v1206
  %v1259 = vpack.c.b16 %v1211, %v1207
  %v1260 = vpack.c.b16 %v1212, %v1208
  %v1261 = vpack.c.b16 %v1217, %v1213
  %v1262 = vpack.c.b16 %v1218, %v1214
  %v1263 = vpack.c.b16 %v1219, %v1215
  %v1264 = vpack.c.b16 %v1220, %v1216
  %v1265 = vpack.c.b16 %v1225, %v1221
  %v1266 = vpack.c.b16 %v1226, %v1222
  %v1267 = vpack.c.b16 %v1227, %v1223
  %v1268 = vpack.c.b16 %v1228, %v1224
  %v1269 = vpack.c.b16 %v1233, %v1229
  %v1270 = vpack.c.b16 %v1234, %v1230
  %v1271 = vpack.c.b16 %v1235, %v1231
  %v1272 = vpack.c.b16 %v1236, %v1232
  %v1273 = vpack.c.b16 %v1241, %v1237
  %v1274 = vpack.c.b16 %v1242, %v1238
  %v1275 = vpack.c.b16 %v1243, %v1239
  %v1276 = vpack.c.b16 %v1244, %v1240
  %1309 = vmatpush.bf16.msra.mxu0 %v1273
  %1310 = vmatpush.bf16.msra.mxu0 %v1269
  %1311 = vmatpush.bf16.msra.mxu0 %v1265
  %1312 = vmatpush.bf16.msra.mxu0 %v1261
  %1313 = vmatpush.bf16.msra.mxu0 %v1257
  %1314 = vmatpush.bf16.msra.mxu0 %v1253
  %1315 = vmatpush.bf16.msra.mxu0 %v1249
  %1316 = vmatpush.bf16.msra.mxu0 %v1245
  %1317 = vmatmul.bf16.gmra.mxu0 %v1139
  %v1318 = vpop.f32.mrf.mxu0
  %v1319 = vadd.f32 %v1141, %v1318
  %v1320 = vpop.f32.mrf.mxu0
  %1321 = vdwg.mxu0
  %1322 = vmatpush.bf16.msra.mxu0 %v1274
  %1323 = vmatpush.bf16.msra.mxu0 %v1270
  %1324 = vmatpush.bf16.msra.mxu0 %v1266
  %1325 = vmatpush.bf16.msra.mxu0 %v1262
  %1326 = vmatpush.bf16.msra.mxu0 %v1258
  %1327 = vmatpush.bf16.msra.mxu0 %v1254
  %1328 = vmatpush.bf16.msra.mxu0 %v1250
  %1329 = vmatpush.bf16.msra.mxu0 %v1246
  %1330 = vmatmul.bf16.gmra.mxu0 %v1139
  %v1331 = vpop.f32.mrf.mxu0
  %v1332 = vadd.f32 %v1142, %v1331
  %v1333 = vpop.f32.mrf.mxu0
  %1334 = vdwg.mxu0
  %1335 = vmatpush.bf16.msra.mxu0 %v1275
  %1336 = vmatpush.bf16.msra.mxu0 %v1271
  %1337 = vmatpush.bf16.msra.mxu0 %v1267
  %1338 = vmatpush.bf16.msra.mxu0 %v1263
  %1339 = vmatpush.bf16.msra.mxu0 %v1259
  %1340 = vmatpush.bf16.msra.mxu0 %v1255
  %1341 = vmatpush.bf16.msra.mxu0 %v1251
  %1342 = vmatpush.bf16.msra.mxu0 %v1247
  %1343 = vmatmul.bf16.gmra.mxu0 %v1139
  %v1344 = vpop.f32.mrf.mxu0
  %v1345 = vadd.f32 %v1143, %v1344
  %v1346 = vpop.f32.mrf.mxu0
  %1347 = vdwg.mxu0
  %1348 = vmatpush.bf16.msra.mxu0 %v1276
  %1349 = vmatpush.bf16.msra.mxu0 %v1272
  %1350 = vmatpush.bf16.msra.mxu0 %v1268
  %1351 = vmatpush.bf16.msra.mxu0 %v1264
  %1352 = vmatpush.bf16.msra.mxu0 %v1260
  %1353 = vmatpush.bf16.msra.mxu0 %v1256
  %1354 = vmatpush.bf16.msra.mxu0 %v1252
  %1355 = vmatpush.bf16.msra.mxu0 %v1248
  %1356 = vmatmul.bf16.gmra.mxu0 %v1139
  %v1357 = vpop.f32.mrf.mxu0
  %v1358 = vadd.f32 %v1144, %v1357
  %v1359 = vpop.f32.mrf.mxu0
  %1360 = vdwg.mxu0
  %v1361 = vpack.c.bf16 %v1319, %v1319
  %v1362 = vpack.c.bf16 %v1332, %v1332
  %1363 = vmatpush.bf16.xpose.msra.mxu0 0
  %1364 = vmatpush.bf16.xpose.msra.mxu0 0
  %1365 = vmatpush.bf16.xpose.msra.mxu0 0
  %1366 = vmatpush.bf16.xpose.msra.mxu0 0
  %1367 = vmatpush.bf16.xpose.msra.mxu0 0
  %1368 = vmatpush.bf16.xpose.msra.mxu0 0
  %1369 = vmatpush.bf16.xpose.msra.mxu0 0
  %1370 = vmatpush.bf16.xpose.msra.mxu0 %v1362
  %1371 = vmatmul.bf16.gmra.mxu0 %v1361
  %v1372 = vpop.f32.mrf.mxu0
  %v1373 = vadd.f32 %v57, %v1372
  %v1374 = vpop.f32.mrf.mxu0
  %1375 = vdwg.mxu0
  %v1376 = vsel %vm328, %v1373, -inf
  %1377 = vmax.xlane.f32.xlu0 %v1376
  %v1378 = vpop.xlane.xlu0 %1377
  %v1379 = vsub.f32 %v1373, %v1378
  %v1380 = vmul.f32 %v1379, 1.442695
  %v1381 = vpow.pop %v1380
  %v1382 = vmul.f32 %v1381, %v56
  %v1383 = vsel %vm328, %v1382, 0.0
  %1384 = vadd.xlane.f32.xlu0 %v1383
  %v1385 = vpop.xlane.xlu0 %1384
  %v1386 = vmax.f32 %v1385, 1e-16
  %v1387 = vrcp.pop %v1386
  %v1388 = vmul.f32 %v1382, %v1387
  %v1389 = vpack.c.bf16 %v1388, %v1388
  %v1390 = vpack.c.bf16 %v1345, %v1345
  %v1392 = vsel %vm328, %v1389, 0
  %v1395 = vsel %vm347, %v1390, 0
  %1397 = vmatpush.bf16.msra.mxu0 0
  %1398 = vmatpush.bf16.msra.mxu0 0
  %1399 = vmatpush.bf16.msra.mxu0 0
  %1400 = vmatpush.bf16.msra.mxu0 0
  %1401 = vmatpush.bf16.msra.mxu0 0
  %1402 = vmatpush.bf16.msra.mxu0 0
  %1403 = vmatpush.bf16.msra.mxu0 0
  %1404 = vmatpush.bf16.msra.mxu0 %v1395
  %1405 = vmatmul.bf16.gmra.mxu0 %v1392
  %v1406 = vpop.f32.mrf.mxu0
  %v1407 = vadd.f32 %v1358, %v1406
  %v1408 = vpop.f32.mrf.mxu0
  %1409 = vdwg.mxu0
  %s1410 = scalar_lea.vmem %s5, 6
  %v1411 = vld [vmem:[%s1410] sm:$0x3]
  %v1412 = vrot.slane %v1407, 4
  %v1413 = vadd.f32 %v1407, %v1412
  %v1414 = vrot.slane %v1413, 2
  %v1415 = vadd.f32 %v1413, %v1414
  %v1416 = vrot.slane %v1415, 1
  %v1417 = vadd.f32 %v1415, %v1416
  %v1418 = vmul.f32 %v1407, %v1407
  %v1419 = vrot.slane %v1418, 4
  %v1420 = vadd.f32 %v1418, %v1419
  %v1421 = vrot.slane %v1420, 2
  %v1422 = vadd.f32 %v1420, %v1421
  %v1423 = vrot.slane %v1422, 1
  %v1424 = vadd.f32 %v1422, %v1423
  %v1425 = vmul.f32 %v1417, 0.125
  %v1426 = vmul.f32 %v1424, 0.125
  %v1427 = vmul.f32 %v1425, %v1425
  %v1428 = vsub.f32 %v1426, %v1427
  %v1429 = vmax.f32 %v1428, 0.0
  %v1430 = vadd.f32 %v1429, 1e-05
  %v1431 = vrsqrt.pop %v1430
  %v1432 = vmul.f32 %v1431, %v1430
  %v1433 = vmul.f32 %v1432, %v1431
  %v1434 = vmul.f32 0.5, %v1433
  %v1435 = vsub.f32 1.5, %v1434
  %v1436 = vmul.f32 %v1431, %v1435
  %vm1437 = vweird.f32 %v1430
  %vm1438 = vweird.f32 %v1431
  %vm1439 = vmor %vm1437, %vm1438
  %v1440 = vsel %vm1439, %v1431, %v1436
  %v1441 = vmul.f32 %v1411, %v1440
  %v1442 = vmul.f32 %v1425, %v1441
  %v1444 = vrot.slane %v1442, 7
  %v1446 = vsub.f32 %v1411, %v1444
  %v1447 = vperm.slane %v1441, 0
  %v1448 = vmul.f32 %v1407, %v1447
  %v1449 = vperm.slane %v1446, 1
  %v1450 = vadd.f32 %v1448, %v1449
  %v1451 = vadd.f32 %v1450, %v753
  %v1452 = vmax.f32 %v1451, 0.0
  %v1453 = vadd.f32 %v755, %v1040
  %v1454 = vadd.f32 %v1453, %v1388
  %s1455 = scalar_lea.vmem %s3, 1024
  %v1456 = vld [vmem:[%s1455] sm:$0xff]
  %v1457 = vld [vmem:[%s1455 + $0x8] sm:$0xff]
  %v1458 = vld [vmem:[%s1455 + $0x10] sm:$0xff]
  %v1459 = vld [vmem:[%s1455 + $0x18] sm:$0xff]
  %v1460 = vld [vmem:[%s1455 + $0x20] sm:$0xff]
  %v1461 = vld [vmem:[%s1455 + $0x28] sm:$0xff]
  %v1462 = vld [vmem:[%s1455 + $0x30] sm:$0xff]
  %v1463 = vld [vmem:[%s1455 + $0x38] sm:$0xff]
  %v1464 = vld [vmem:[%s1455 + $0x40] sm:$0xff]
  %v1465 = vld [vmem:[%s1455 + $0x48] sm:$0xff]
  %v1466 = vld [vmem:[%s1455 + $0x50] sm:$0xff]
  %v1467 = vld [vmem:[%s1455 + $0x58] sm:$0xff]
  %v1468 = vld [vmem:[%s1455 + $0x60] sm:$0xff]
  %v1469 = vld [vmem:[%s1455 + $0x68] sm:$0xff]
  %v1470 = vld [vmem:[%s1455 + $0x70] sm:$0xff]
  %v1471 = vld [vmem:[%s1455 + $0x78] sm:$0xff]
  %v1472 = vld [vmem:[%s1455 + $0x80] sm:$0xff]
  %v1473 = vld [vmem:[%s1455 + $0x88] sm:$0xff]
  %v1474 = vld [vmem:[%s1455 + $0x90] sm:$0xff]
  %v1475 = vld [vmem:[%s1455 + $0x98] sm:$0xff]
  %v1476 = vld [vmem:[%s1455 + $0xa0] sm:$0xff]
  %v1477 = vld [vmem:[%s1455 + $0xa8] sm:$0xff]
  %v1478 = vld [vmem:[%s1455 + $0xb0] sm:$0xff]
  %v1479 = vld [vmem:[%s1455 + $0xb8] sm:$0xff]
  %v1480 = vld [vmem:[%s1455 + $0xc0] sm:$0xff]
  %v1481 = vld [vmem:[%s1455 + $0xc8] sm:$0xff]
  %v1482 = vld [vmem:[%s1455 + $0xd0] sm:$0xff]
  %v1483 = vld [vmem:[%s1455 + $0xd8] sm:$0xff]
  %v1484 = vld [vmem:[%s1455 + $0xe0] sm:$0xff]
  %v1485 = vld [vmem:[%s1455 + $0xe8] sm:$0xff]
  %v1486 = vld [vmem:[%s1455 + $0xf0] sm:$0xff]
  %v1487 = vld [vmem:[%s1455 + $0xf8] sm:$0xff]
  %s1488 = scalar_lea.vmem %s4, 16
  %v1489 = vld [vmem:[%s1488] sm:$0xf]
  %v1490 = vpack.c.bf16 %v1452, %v1452
  %v1492 = vperm.slane %v1489, 0
  %v1493 = vperm.slane %v1489, 1
  %v1494 = vperm.slane %v1489, 2
  %v1495 = vperm.slane %v1489, 3
  %v1532 = vunpack.c.l.b16 %v1456
  %v1533 = vunpack.c.h.b16 %v1456
  %v1534 = vunpack.c.l.b16 %v1457
  %v1535 = vunpack.c.h.b16 %v1457
  %v1536 = vunpack.c.l.b16 %v1458
  %v1537 = vunpack.c.h.b16 %v1458
  %v1538 = vunpack.c.l.b16 %v1459
  %v1539 = vunpack.c.h.b16 %v1459
  %v1540 = vunpack.c.l.b16 %v1460
  %v1541 = vunpack.c.h.b16 %v1460
  %v1542 = vunpack.c.l.b16 %v1461
  %v1543 = vunpack.c.h.b16 %v1461
  %v1544 = vunpack.c.l.b16 %v1462
  %v1545 = vunpack.c.h.b16 %v1462
  %v1546 = vunpack.c.l.b16 %v1463
  %v1547 = vunpack.c.h.b16 %v1463
  %v1548 = vunpack.c.l.b16 %v1464
  %v1549 = vunpack.c.h.b16 %v1464
  %v1550 = vunpack.c.l.b16 %v1465
  %v1551 = vunpack.c.h.b16 %v1465
  %v1552 = vunpack.c.l.b16 %v1466
  %v1553 = vunpack.c.h.b16 %v1466
  %v1554 = vunpack.c.l.b16 %v1467
  %v1555 = vunpack.c.h.b16 %v1467
  %v1556 = vunpack.c.l.b16 %v1468
  %v1557 = vunpack.c.h.b16 %v1468
  %v1558 = vunpack.c.l.b16 %v1469
  %v1559 = vunpack.c.h.b16 %v1469
  %v1560 = vunpack.c.l.b16 %v1470
  %v1561 = vunpack.c.h.b16 %v1470
  %v1562 = vunpack.c.l.b16 %v1471
  %v1563 = vunpack.c.h.b16 %v1471
  %v1564 = vunpack.c.l.b16 %v1472
  %v1565 = vunpack.c.h.b16 %v1472
  %v1566 = vunpack.c.l.b16 %v1473
  %v1567 = vunpack.c.h.b16 %v1473
  %v1568 = vunpack.c.l.b16 %v1474
  %v1569 = vunpack.c.h.b16 %v1474
  %v1570 = vunpack.c.l.b16 %v1475
  %v1571 = vunpack.c.h.b16 %v1475
  %v1572 = vunpack.c.l.b16 %v1476
  %v1573 = vunpack.c.h.b16 %v1476
  %v1574 = vunpack.c.l.b16 %v1477
  %v1575 = vunpack.c.h.b16 %v1477
  %v1576 = vunpack.c.l.b16 %v1478
  %v1577 = vunpack.c.h.b16 %v1478
  %v1578 = vunpack.c.l.b16 %v1479
  %v1579 = vunpack.c.h.b16 %v1479
  %v1580 = vunpack.c.l.b16 %v1480
  %v1581 = vunpack.c.h.b16 %v1480
  %v1582 = vunpack.c.l.b16 %v1481
  %v1583 = vunpack.c.h.b16 %v1481
  %v1584 = vunpack.c.l.b16 %v1482
  %v1585 = vunpack.c.h.b16 %v1482
  %v1586 = vunpack.c.l.b16 %v1483
  %v1587 = vunpack.c.h.b16 %v1483
  %v1588 = vunpack.c.l.b16 %v1484
  %v1589 = vunpack.c.h.b16 %v1484
  %v1590 = vunpack.c.l.b16 %v1485
  %v1591 = vunpack.c.h.b16 %v1485
  %v1592 = vunpack.c.l.b16 %v1486
  %v1593 = vunpack.c.h.b16 %v1486
  %v1594 = vunpack.c.l.b16 %v1487
  %v1595 = vunpack.c.h.b16 %v1487
  %v1596 = vpack.c.b16 %v1536, %v1532
  %v1597 = vpack.c.b16 %v1537, %v1533
  %v1598 = vpack.c.b16 %v1538, %v1534
  %v1599 = vpack.c.b16 %v1539, %v1535
  %v1600 = vpack.c.b16 %v1544, %v1540
  %v1601 = vpack.c.b16 %v1545, %v1541
  %v1602 = vpack.c.b16 %v1546, %v1542
  %v1603 = vpack.c.b16 %v1547, %v1543
  %v1604 = vpack.c.b16 %v1552, %v1548
  %v1605 = vpack.c.b16 %v1553, %v1549
  %v1606 = vpack.c.b16 %v1554, %v1550
  %v1607 = vpack.c.b16 %v1555, %v1551
  %v1608 = vpack.c.b16 %v1560, %v1556
  %v1609 = vpack.c.b16 %v1561, %v1557
  %v1610 = vpack.c.b16 %v1562, %v1558
  %v1611 = vpack.c.b16 %v1563, %v1559
  %v1612 = vpack.c.b16 %v1568, %v1564
  %v1613 = vpack.c.b16 %v1569, %v1565
  %v1614 = vpack.c.b16 %v1570, %v1566
  %v1615 = vpack.c.b16 %v1571, %v1567
  %v1616 = vpack.c.b16 %v1576, %v1572
  %v1617 = vpack.c.b16 %v1577, %v1573
  %v1618 = vpack.c.b16 %v1578, %v1574
  %v1619 = vpack.c.b16 %v1579, %v1575
  %v1620 = vpack.c.b16 %v1584, %v1580
  %v1621 = vpack.c.b16 %v1585, %v1581
  %v1622 = vpack.c.b16 %v1586, %v1582
  %v1623 = vpack.c.b16 %v1587, %v1583
  %v1624 = vpack.c.b16 %v1592, %v1588
  %v1625 = vpack.c.b16 %v1593, %v1589
  %v1626 = vpack.c.b16 %v1594, %v1590
  %v1627 = vpack.c.b16 %v1595, %v1591
  %1660 = vmatpush.bf16.msra.mxu0 %v1624
  %1661 = vmatpush.bf16.msra.mxu0 %v1620
  %1662 = vmatpush.bf16.msra.mxu0 %v1616
  %1663 = vmatpush.bf16.msra.mxu0 %v1612
  %1664 = vmatpush.bf16.msra.mxu0 %v1608
  %1665 = vmatpush.bf16.msra.mxu0 %v1604
  %1666 = vmatpush.bf16.msra.mxu0 %v1600
  %1667 = vmatpush.bf16.msra.mxu0 %v1596
  %1668 = vmatmul.bf16.gmra.mxu0 %v1490
  %v1669 = vpop.f32.mrf.mxu0
  %v1670 = vadd.f32 %v1492, %v1669
  %v1671 = vpop.f32.mrf.mxu0
  %1672 = vdwg.mxu0
  %1673 = vmatpush.bf16.msra.mxu0 %v1625
  %1674 = vmatpush.bf16.msra.mxu0 %v1621
  %1675 = vmatpush.bf16.msra.mxu0 %v1617
  %1676 = vmatpush.bf16.msra.mxu0 %v1613
  %1677 = vmatpush.bf16.msra.mxu0 %v1609
  %1678 = vmatpush.bf16.msra.mxu0 %v1605
  %1679 = vmatpush.bf16.msra.mxu0 %v1601
  %1680 = vmatpush.bf16.msra.mxu0 %v1597
  %1681 = vmatmul.bf16.gmra.mxu0 %v1490
  %v1682 = vpop.f32.mrf.mxu0
  %v1683 = vadd.f32 %v1493, %v1682
  %v1684 = vpop.f32.mrf.mxu0
  %1685 = vdwg.mxu0
  %1686 = vmatpush.bf16.msra.mxu0 %v1626
  %1687 = vmatpush.bf16.msra.mxu0 %v1622
  %1688 = vmatpush.bf16.msra.mxu0 %v1618
  %1689 = vmatpush.bf16.msra.mxu0 %v1614
  %1690 = vmatpush.bf16.msra.mxu0 %v1610
  %1691 = vmatpush.bf16.msra.mxu0 %v1606
  %1692 = vmatpush.bf16.msra.mxu0 %v1602
  %1693 = vmatpush.bf16.msra.mxu0 %v1598
  %1694 = vmatmul.bf16.gmra.mxu0 %v1490
  %v1695 = vpop.f32.mrf.mxu0
  %v1696 = vadd.f32 %v1494, %v1695
  %v1697 = vpop.f32.mrf.mxu0
  %1698 = vdwg.mxu0
  %1699 = vmatpush.bf16.msra.mxu0 %v1627
  %1700 = vmatpush.bf16.msra.mxu0 %v1623
  %1701 = vmatpush.bf16.msra.mxu0 %v1619
  %1702 = vmatpush.bf16.msra.mxu0 %v1615
  %1703 = vmatpush.bf16.msra.mxu0 %v1611
  %1704 = vmatpush.bf16.msra.mxu0 %v1607
  %1705 = vmatpush.bf16.msra.mxu0 %v1603
  %1706 = vmatpush.bf16.msra.mxu0 %v1599
  %1707 = vmatmul.bf16.gmra.mxu0 %v1490
  %v1708 = vpop.f32.mrf.mxu0
  %v1709 = vadd.f32 %v1495, %v1708
  %v1710 = vpop.f32.mrf.mxu0
  %1711 = vdwg.mxu0
  %v1712 = vpack.c.bf16 %v1670, %v1670
  %v1713 = vpack.c.bf16 %v1683, %v1683
  %1714 = vmatpush.bf16.xpose.msra.mxu0 0
  %1715 = vmatpush.bf16.xpose.msra.mxu0 0
  %1716 = vmatpush.bf16.xpose.msra.mxu0 0
  %1717 = vmatpush.bf16.xpose.msra.mxu0 0
  %1718 = vmatpush.bf16.xpose.msra.mxu0 0
  %1719 = vmatpush.bf16.xpose.msra.mxu0 0
  %1720 = vmatpush.bf16.xpose.msra.mxu0 0
  %1721 = vmatpush.bf16.xpose.msra.mxu0 %v1713
  %1722 = vmatmul.bf16.gmra.mxu0 %v1712
  %v1723 = vpop.f32.mrf.mxu0
  %v1724 = vadd.f32 %v57, %v1723
  %v1725 = vpop.f32.mrf.mxu0
  %1726 = vdwg.mxu0
  %v1727 = vsel %vm328, %v1724, -inf
  %1728 = vmax.xlane.f32.xlu0 %v1727
  %v1729 = vpop.xlane.xlu0 %1728
  %v1730 = vsub.f32 %v1724, %v1729
  %v1731 = vmul.f32 %v1730, 1.442695
  %v1732 = vpow.pop %v1731
  %v1733 = vmul.f32 %v1732, %v56
  %v1734 = vsel %vm328, %v1733, 0.0
  %1735 = vadd.xlane.f32.xlu0 %v1734
  %v1736 = vpop.xlane.xlu0 %1735
  %v1737 = vmax.f32 %v1736, 1e-16
  %v1738 = vrcp.pop %v1737
  %v1739 = vmul.f32 %v1733, %v1738
  %v1740 = vpack.c.bf16 %v1739, %v1739
  %v1741 = vpack.c.bf16 %v1696, %v1696
  %v1743 = vsel %vm328, %v1740, 0
  %v1746 = vsel %vm347, %v1741, 0
  %1748 = vmatpush.bf16.msra.mxu0 0
  %1749 = vmatpush.bf16.msra.mxu0 0
  %1750 = vmatpush.bf16.msra.mxu0 0
  %1751 = vmatpush.bf16.msra.mxu0 0
  %1752 = vmatpush.bf16.msra.mxu0 0
  %1753 = vmatpush.bf16.msra.mxu0 0
  %1754 = vmatpush.bf16.msra.mxu0 0
  %1755 = vmatpush.bf16.msra.mxu0 %v1746
  %1756 = vmatmul.bf16.gmra.mxu0 %v1743
  %v1757 = vpop.f32.mrf.mxu0
  %v1758 = vadd.f32 %v1709, %v1757
  %v1759 = vpop.f32.mrf.mxu0
  %1760 = vdwg.mxu0
  %s1761 = scalar_lea.vmem %s5, 8
  %v1762 = vld [vmem:[%s1761] sm:$0x3]
  %v1763 = vrot.slane %v1758, 4
  %v1764 = vadd.f32 %v1758, %v1763
  %v1765 = vrot.slane %v1764, 2
  %v1766 = vadd.f32 %v1764, %v1765
  %v1767 = vrot.slane %v1766, 1
  %v1768 = vadd.f32 %v1766, %v1767
  %v1769 = vmul.f32 %v1758, %v1758
  %v1770 = vrot.slane %v1769, 4
  %v1771 = vadd.f32 %v1769, %v1770
  %v1772 = vrot.slane %v1771, 2
  %v1773 = vadd.f32 %v1771, %v1772
  %v1774 = vrot.slane %v1773, 1
  %v1775 = vadd.f32 %v1773, %v1774
  %v1776 = vmul.f32 %v1768, 0.125
  %v1777 = vmul.f32 %v1775, 0.125
  %v1778 = vmul.f32 %v1776, %v1776
  %v1779 = vsub.f32 %v1777, %v1778
  %v1780 = vmax.f32 %v1779, 0.0
  %v1781 = vadd.f32 %v1780, 1e-05
  %v1782 = vrsqrt.pop %v1781
  %v1783 = vmul.f32 %v1782, %v1781
  %v1784 = vmul.f32 %v1783, %v1782
  %v1785 = vmul.f32 0.5, %v1784
  %v1786 = vsub.f32 1.5, %v1785
  %v1787 = vmul.f32 %v1782, %v1786
  %vm1788 = vweird.f32 %v1781
  %vm1789 = vweird.f32 %v1782
  %vm1790 = vmor %vm1788, %vm1789
  %v1791 = vsel %vm1790, %v1782, %v1787
  %v1792 = vmul.f32 %v1762, %v1791
  %v1793 = vmul.f32 %v1776, %v1792
  %v1795 = vrot.slane %v1793, 7
  %v1797 = vsub.f32 %v1762, %v1795
  %v1798 = vperm.slane %v1792, 0
  %v1799 = vmul.f32 %v1758, %v1798
  %v1800 = vperm.slane %v1797, 1
  %v1801 = vadd.f32 %v1799, %v1800
  %v1802 = vmax.f32 %v1801, 0.0
  %s1803 = scalar_lea.vmem %s3, 1280
  %v1804 = vld [vmem:[%s1803] sm:$0xff]
  %v1805 = vld [vmem:[%s1803 + $0x8] sm:$0xff]
  %v1806 = vld [vmem:[%s1803 + $0x10] sm:$0xff]
  %v1807 = vld [vmem:[%s1803 + $0x18] sm:$0xff]
  %v1808 = vld [vmem:[%s1803 + $0x20] sm:$0xff]
  %v1809 = vld [vmem:[%s1803 + $0x28] sm:$0xff]
  %v1810 = vld [vmem:[%s1803 + $0x30] sm:$0xff]
  %v1811 = vld [vmem:[%s1803 + $0x38] sm:$0xff]
  %v1812 = vld [vmem:[%s1803 + $0x40] sm:$0xff]
  %v1813 = vld [vmem:[%s1803 + $0x48] sm:$0xff]
  %v1814 = vld [vmem:[%s1803 + $0x50] sm:$0xff]
  %v1815 = vld [vmem:[%s1803 + $0x58] sm:$0xff]
  %v1816 = vld [vmem:[%s1803 + $0x60] sm:$0xff]
  %v1817 = vld [vmem:[%s1803 + $0x68] sm:$0xff]
  %v1818 = vld [vmem:[%s1803 + $0x70] sm:$0xff]
  %v1819 = vld [vmem:[%s1803 + $0x78] sm:$0xff]
  %v1820 = vld [vmem:[%s1803 + $0x80] sm:$0xff]
  %v1821 = vld [vmem:[%s1803 + $0x88] sm:$0xff]
  %v1822 = vld [vmem:[%s1803 + $0x90] sm:$0xff]
  %v1823 = vld [vmem:[%s1803 + $0x98] sm:$0xff]
  %v1824 = vld [vmem:[%s1803 + $0xa0] sm:$0xff]
  %v1825 = vld [vmem:[%s1803 + $0xa8] sm:$0xff]
  %v1826 = vld [vmem:[%s1803 + $0xb0] sm:$0xff]
  %v1827 = vld [vmem:[%s1803 + $0xb8] sm:$0xff]
  %v1828 = vld [vmem:[%s1803 + $0xc0] sm:$0xff]
  %v1829 = vld [vmem:[%s1803 + $0xc8] sm:$0xff]
  %v1830 = vld [vmem:[%s1803 + $0xd0] sm:$0xff]
  %v1831 = vld [vmem:[%s1803 + $0xd8] sm:$0xff]
  %v1832 = vld [vmem:[%s1803 + $0xe0] sm:$0xff]
  %v1833 = vld [vmem:[%s1803 + $0xe8] sm:$0xff]
  %v1834 = vld [vmem:[%s1803 + $0xf0] sm:$0xff]
  %v1835 = vld [vmem:[%s1803 + $0xf8] sm:$0xff]
  %s1836 = scalar_lea.vmem %s4, 20
  %v1837 = vld [vmem:[%s1836] sm:$0xf]
  %v1838 = vpack.c.bf16 %v1802, %v1802
  %v1840 = vperm.slane %v1837, 0
  %v1841 = vperm.slane %v1837, 1
  %v1842 = vperm.slane %v1837, 2
  %v1843 = vperm.slane %v1837, 3
  %v1880 = vunpack.c.l.b16 %v1804
  %v1881 = vunpack.c.h.b16 %v1804
  %v1882 = vunpack.c.l.b16 %v1805
  %v1883 = vunpack.c.h.b16 %v1805
  %v1884 = vunpack.c.l.b16 %v1806
  %v1885 = vunpack.c.h.b16 %v1806
  %v1886 = vunpack.c.l.b16 %v1807
  %v1887 = vunpack.c.h.b16 %v1807
  %v1888 = vunpack.c.l.b16 %v1808
  %v1889 = vunpack.c.h.b16 %v1808
  %v1890 = vunpack.c.l.b16 %v1809
  %v1891 = vunpack.c.h.b16 %v1809
  %v1892 = vunpack.c.l.b16 %v1810
  %v1893 = vunpack.c.h.b16 %v1810
  %v1894 = vunpack.c.l.b16 %v1811
  %v1895 = vunpack.c.h.b16 %v1811
  %v1896 = vunpack.c.l.b16 %v1812
  %v1897 = vunpack.c.h.b16 %v1812
  %v1898 = vunpack.c.l.b16 %v1813
  %v1899 = vunpack.c.h.b16 %v1813
  %v1900 = vunpack.c.l.b16 %v1814
  %v1901 = vunpack.c.h.b16 %v1814
  %v1902 = vunpack.c.l.b16 %v1815
  %v1903 = vunpack.c.h.b16 %v1815
  %v1904 = vunpack.c.l.b16 %v1816
  %v1905 = vunpack.c.h.b16 %v1816
  %v1906 = vunpack.c.l.b16 %v1817
  %v1907 = vunpack.c.h.b16 %v1817
  %v1908 = vunpack.c.l.b16 %v1818
  %v1909 = vunpack.c.h.b16 %v1818
  %v1910 = vunpack.c.l.b16 %v1819
  %v1911 = vunpack.c.h.b16 %v1819
  %v1912 = vunpack.c.l.b16 %v1820
  %v1913 = vunpack.c.h.b16 %v1820
  %v1914 = vunpack.c.l.b16 %v1821
  %v1915 = vunpack.c.h.b16 %v1821
  %v1916 = vunpack.c.l.b16 %v1822
  %v1917 = vunpack.c.h.b16 %v1822
  %v1918 = vunpack.c.l.b16 %v1823
  %v1919 = vunpack.c.h.b16 %v1823
  %v1920 = vunpack.c.l.b16 %v1824
  %v1921 = vunpack.c.h.b16 %v1824
  %v1922 = vunpack.c.l.b16 %v1825
  %v1923 = vunpack.c.h.b16 %v1825
  %v1924 = vunpack.c.l.b16 %v1826
  %v1925 = vunpack.c.h.b16 %v1826
  %v1926 = vunpack.c.l.b16 %v1827
  %v1927 = vunpack.c.h.b16 %v1827
  %v1928 = vunpack.c.l.b16 %v1828
  %v1929 = vunpack.c.h.b16 %v1828
  %v1930 = vunpack.c.l.b16 %v1829
  %v1931 = vunpack.c.h.b16 %v1829
  %v1932 = vunpack.c.l.b16 %v1830
  %v1933 = vunpack.c.h.b16 %v1830
  %v1934 = vunpack.c.l.b16 %v1831
  %v1935 = vunpack.c.h.b16 %v1831
  %v1936 = vunpack.c.l.b16 %v1832
  %v1937 = vunpack.c.h.b16 %v1832
  %v1938 = vunpack.c.l.b16 %v1833
  %v1939 = vunpack.c.h.b16 %v1833
  %v1940 = vunpack.c.l.b16 %v1834
  %v1941 = vunpack.c.h.b16 %v1834
  %v1942 = vunpack.c.l.b16 %v1835
  %v1943 = vunpack.c.h.b16 %v1835
  %v1944 = vpack.c.b16 %v1884, %v1880
  %v1945 = vpack.c.b16 %v1885, %v1881
  %v1946 = vpack.c.b16 %v1886, %v1882
  %v1947 = vpack.c.b16 %v1887, %v1883
  %v1948 = vpack.c.b16 %v1892, %v1888
  %v1949 = vpack.c.b16 %v1893, %v1889
  %v1950 = vpack.c.b16 %v1894, %v1890
  %v1951 = vpack.c.b16 %v1895, %v1891
  %v1952 = vpack.c.b16 %v1900, %v1896
  %v1953 = vpack.c.b16 %v1901, %v1897
  %v1954 = vpack.c.b16 %v1902, %v1898
  %v1955 = vpack.c.b16 %v1903, %v1899
  %v1956 = vpack.c.b16 %v1908, %v1904
  %v1957 = vpack.c.b16 %v1909, %v1905
  %v1958 = vpack.c.b16 %v1910, %v1906
  %v1959 = vpack.c.b16 %v1911, %v1907
  %v1960 = vpack.c.b16 %v1916, %v1912
  %v1961 = vpack.c.b16 %v1917, %v1913
  %v1962 = vpack.c.b16 %v1918, %v1914
  %v1963 = vpack.c.b16 %v1919, %v1915
  %v1964 = vpack.c.b16 %v1924, %v1920
  %v1965 = vpack.c.b16 %v1925, %v1921
  %v1966 = vpack.c.b16 %v1926, %v1922
  %v1967 = vpack.c.b16 %v1927, %v1923
  %v1968 = vpack.c.b16 %v1932, %v1928
  %v1969 = vpack.c.b16 %v1933, %v1929
  %v1970 = vpack.c.b16 %v1934, %v1930
  %v1971 = vpack.c.b16 %v1935, %v1931
  %v1972 = vpack.c.b16 %v1940, %v1936
  %v1973 = vpack.c.b16 %v1941, %v1937
  %v1974 = vpack.c.b16 %v1942, %v1938
  %v1975 = vpack.c.b16 %v1943, %v1939
  %2008 = vmatpush.bf16.msra.mxu0 %v1972
  %2009 = vmatpush.bf16.msra.mxu0 %v1968
  %2010 = vmatpush.bf16.msra.mxu0 %v1964
  %2011 = vmatpush.bf16.msra.mxu0 %v1960
  %2012 = vmatpush.bf16.msra.mxu0 %v1956
  %2013 = vmatpush.bf16.msra.mxu0 %v1952
  %2014 = vmatpush.bf16.msra.mxu0 %v1948
  %2015 = vmatpush.bf16.msra.mxu0 %v1944
  %2016 = vmatmul.bf16.gmra.mxu0 %v1838
  %v2017 = vpop.f32.mrf.mxu0
  %v2018 = vadd.f32 %v1840, %v2017
  %v2019 = vpop.f32.mrf.mxu0
  %2020 = vdwg.mxu0
  %2021 = vmatpush.bf16.msra.mxu0 %v1973
  %2022 = vmatpush.bf16.msra.mxu0 %v1969
  %2023 = vmatpush.bf16.msra.mxu0 %v1965
  %2024 = vmatpush.bf16.msra.mxu0 %v1961
  %2025 = vmatpush.bf16.msra.mxu0 %v1957
  %2026 = vmatpush.bf16.msra.mxu0 %v1953
  %2027 = vmatpush.bf16.msra.mxu0 %v1949
  %2028 = vmatpush.bf16.msra.mxu0 %v1945
  %2029 = vmatmul.bf16.gmra.mxu0 %v1838
  %v2030 = vpop.f32.mrf.mxu0
  %v2031 = vadd.f32 %v1841, %v2030
  %v2032 = vpop.f32.mrf.mxu0
  %2033 = vdwg.mxu0
  %2034 = vmatpush.bf16.msra.mxu0 %v1974
  %2035 = vmatpush.bf16.msra.mxu0 %v1970
  %2036 = vmatpush.bf16.msra.mxu0 %v1966
  %2037 = vmatpush.bf16.msra.mxu0 %v1962
  %2038 = vmatpush.bf16.msra.mxu0 %v1958
  %2039 = vmatpush.bf16.msra.mxu0 %v1954
  %2040 = vmatpush.bf16.msra.mxu0 %v1950
  %2041 = vmatpush.bf16.msra.mxu0 %v1946
  %2042 = vmatmul.bf16.gmra.mxu0 %v1838
  %v2043 = vpop.f32.mrf.mxu0
  %v2044 = vadd.f32 %v1842, %v2043
  %v2045 = vpop.f32.mrf.mxu0
  %2046 = vdwg.mxu0
  %2047 = vmatpush.bf16.msra.mxu0 %v1975
  %2048 = vmatpush.bf16.msra.mxu0 %v1971
  %2049 = vmatpush.bf16.msra.mxu0 %v1967
  %2050 = vmatpush.bf16.msra.mxu0 %v1963
  %2051 = vmatpush.bf16.msra.mxu0 %v1959
  %2052 = vmatpush.bf16.msra.mxu0 %v1955
  %2053 = vmatpush.bf16.msra.mxu0 %v1951
  %2054 = vmatpush.bf16.msra.mxu0 %v1947
  %2055 = vmatmul.bf16.gmra.mxu0 %v1838
  %v2056 = vpop.f32.mrf.mxu0
  %v2057 = vadd.f32 %v1843, %v2056
  %v2058 = vpop.f32.mrf.mxu0
  %2059 = vdwg.mxu0
  %v2060 = vpack.c.bf16 %v2018, %v2018
  %v2061 = vpack.c.bf16 %v2031, %v2031
  %2062 = vmatpush.bf16.xpose.msra.mxu0 0
  %2063 = vmatpush.bf16.xpose.msra.mxu0 0
  %2064 = vmatpush.bf16.xpose.msra.mxu0 0
  %2065 = vmatpush.bf16.xpose.msra.mxu0 0
  %2066 = vmatpush.bf16.xpose.msra.mxu0 0
  %2067 = vmatpush.bf16.xpose.msra.mxu0 0
  %2068 = vmatpush.bf16.xpose.msra.mxu0 0
  %2069 = vmatpush.bf16.xpose.msra.mxu0 %v2061
  %2070 = vmatmul.bf16.gmra.mxu0 %v2060
  %v2071 = vpop.f32.mrf.mxu0
  %v2072 = vadd.f32 %v57, %v2071
  %v2073 = vpop.f32.mrf.mxu0
  %2074 = vdwg.mxu0
  %v2075 = vsel %vm328, %v2072, -inf
  %2076 = vmax.xlane.f32.xlu0 %v2075
  %v2077 = vpop.xlane.xlu0 %2076
  %v2078 = vsub.f32 %v2072, %v2077
  %v2079 = vmul.f32 %v2078, 1.442695
  %v2080 = vpow.pop %v2079
  %v2081 = vmul.f32 %v2080, %v56
  %v2082 = vsel %vm328, %v2081, 0.0
  %2083 = vadd.xlane.f32.xlu0 %v2082
  %v2084 = vpop.xlane.xlu0 %2083
  %v2085 = vmax.f32 %v2084, 1e-16
  %v2086 = vrcp.pop %v2085
  %v2087 = vmul.f32 %v2081, %v2086
  %v2088 = vpack.c.bf16 %v2087, %v2087
  %v2089 = vpack.c.bf16 %v2044, %v2044
  %v2091 = vsel %vm328, %v2088, 0
  %v2094 = vsel %vm347, %v2089, 0
  %2096 = vmatpush.bf16.msra.mxu0 0
  %2097 = vmatpush.bf16.msra.mxu0 0
  %2098 = vmatpush.bf16.msra.mxu0 0
  %2099 = vmatpush.bf16.msra.mxu0 0
  %2100 = vmatpush.bf16.msra.mxu0 0
  %2101 = vmatpush.bf16.msra.mxu0 0
  %2102 = vmatpush.bf16.msra.mxu0 0
  %2103 = vmatpush.bf16.msra.mxu0 %v2094
  %2104 = vmatmul.bf16.gmra.mxu0 %v2091
  %v2105 = vpop.f32.mrf.mxu0
  %v2106 = vadd.f32 %v2057, %v2105
  %v2107 = vpop.f32.mrf.mxu0
  %2108 = vdwg.mxu0
  %s2109 = scalar_lea.vmem %s5, 10
  %v2110 = vld [vmem:[%s2109] sm:$0x3]
  %v2111 = vrot.slane %v2106, 4
  %v2112 = vadd.f32 %v2106, %v2111
  %v2113 = vrot.slane %v2112, 2
  %v2114 = vadd.f32 %v2112, %v2113
  %v2115 = vrot.slane %v2114, 1
  %v2116 = vadd.f32 %v2114, %v2115
  %v2117 = vmul.f32 %v2106, %v2106
  %v2118 = vrot.slane %v2117, 4
  %v2119 = vadd.f32 %v2117, %v2118
  %v2120 = vrot.slane %v2119, 2
  %v2121 = vadd.f32 %v2119, %v2120
  %v2122 = vrot.slane %v2121, 1
  %v2123 = vadd.f32 %v2121, %v2122
  %v2124 = vmul.f32 %v2116, 0.125
  %v2125 = vmul.f32 %v2123, 0.125
  %v2126 = vmul.f32 %v2124, %v2124
  %v2127 = vsub.f32 %v2125, %v2126
  %v2128 = vmax.f32 %v2127, 0.0
  %v2129 = vadd.f32 %v2128, 1e-05
  %v2130 = vrsqrt.pop %v2129
  %v2131 = vmul.f32 %v2130, %v2129
  %v2132 = vmul.f32 %v2131, %v2130
  %v2133 = vmul.f32 0.5, %v2132
  %v2134 = vsub.f32 1.5, %v2133
  %v2135 = vmul.f32 %v2130, %v2134
  %vm2136 = vweird.f32 %v2129
  %vm2137 = vweird.f32 %v2130
  %vm2138 = vmor %vm2136, %vm2137
  %v2139 = vsel %vm2138, %v2130, %v2135
  %v2140 = vmul.f32 %v2110, %v2139
  %v2141 = vmul.f32 %v2124, %v2140
  %v2143 = vrot.slane %v2141, 7
  %v2145 = vsub.f32 %v2110, %v2143
  %v2146 = vperm.slane %v2140, 0
  %v2147 = vmul.f32 %v2106, %v2146
  %v2148 = vperm.slane %v2145, 1
  %v2149 = vadd.f32 %v2147, %v2148
  %v2150 = vadd.f32 %v2149, %v1452
  %v2151 = vmax.f32 %v2150, 0.0
  %v2152 = vadd.f32 %v1454, %v1739
  %v2153 = vadd.f32 %v2152, %v2087
  %2154 = vst [vmem:[%s6] sm:$0xff] %v2151
  %v2155 = vpack.c.bf16 %v2153, %v2153
  %v2157 = vsel %vm328, %v2155, 0
  %v2160 = vsel %vm347, %v40, 0
  %2162 = vmatpush.bf16.msra.mxu0 0
  %2163 = vmatpush.bf16.msra.mxu0 0
  %2164 = vmatpush.bf16.msra.mxu0 0
  %2165 = vmatpush.bf16.msra.mxu0 0
  %2166 = vmatpush.bf16.msra.mxu0 0
  %2167 = vmatpush.bf16.msra.mxu0 0
  %2168 = vmatpush.bf16.msra.mxu0 0
  %2169 = vmatpush.bf16.msra.mxu0 %v2160
  %2170 = vmatmul.bf16.gmra.mxu0 %v2157
  %v2171 = vpop.f32.mrf.mxu0
  %v2172 = vadd.f32 0.0, %v2171
  %v2173 = vpop.f32.mrf.mxu0
  %2174 = vdwg.mxu0
  %v2175 = vunpack.c.l.bf16 %v34
  %v2176 = vmul.f32 %v2175, %v2172
  %v2177 = vrot.slane %v2176, 4
  %v2178 = vadd.f32 %v2176, %v2177
  %v2179 = vrot.slane %v2178, 2
  %v2180 = vadd.f32 %v2178, %v2179
  %v2181 = vrot.slane %v2180, 1
  %v2182 = vadd.f32 %v2180, %v2181
  %2183 = vst [vmem:[%s7] sm:$0x1] %v2182
  // Predicated region
  $region26: #{gnn_layer.1} parent=0 // pred_check
    _
  $region27: #{gnn_layer.1} parent=0 // pred_check_branch
    %2185 = sbr.rel (0) target = $region29
  $region28: #{gnn_layer.1} parent=0 // pred_region
    _
  $region29: #{gnn_layer.1} parent=0 // pred_fallthru
    _
  // Predicated region
  $region30: #{gnn_layer.1} parent=0 // pred_check
    _
  $region31: #{gnn_layer.1} parent=0 // pred_check_branch
    %2187 = sbr.rel (0) target = $region33
  $region32: #{gnn_layer.1} parent=0 // pred_region
    _
  $region33: #{gnn_layer.1} parent=0 // pred_fallthru
    _
  // Predicated region
  $region34: #{gnn_layer.1} parent=0 // pred_check
    _
  $region35: #{gnn_layer.1} parent=0 // pred_check_branch
    %2189 = sbr.rel (0) target = $region37
  $region36: #{gnn_layer.1} parent=0 // pred_region
    _
  $region37: #{gnn_layer.1} parent=0 // pred_fallthru
    _
  // Predicated region
  $region38: #{gnn_layer.1} parent=0 // pred_check
    _
  $region39: #{gnn_layer.1} parent=0 // pred_check_branch
    %2191 = sbr.rel (0) target = $region41
  $region40: #{gnn_layer.1} parent=0 // pred_region
    _
  $region41: #{gnn_layer.1} parent=0 // pred_fallthru
    _

</llo_original>
